<compile_context>
chip_gen: v5e
topology: v5e:2x2
jax: 0.10.0
libtpu: 0.0.40
codegen_flags: <defaults>
</compile_context>

<pallas_src>
import numpy as np

import jax
import jax.numpy as jnp
from jax.experimental import pallas as pl
from jax.experimental.pallas import tpu as pltpu

# ----------------------------- configuration --------------------------------
NUM_CHANNELS = 2
CHANNEL_LIST = [2, 8, 16, 32]
NETWORK_LEVELS = 3
LOWER_RESOLUTION = 8
SCALE_FACTOR = 2
KERNEL_SIZE = 16          # kwargs['kernel_size'] in the PyTorch module
MIN_KERNEL_SIZE = 4
NEG_SLOPE = 0.2


def _layer_geometry(layer_num):
    """Replicates D.build_model() kernel-size / padding arithmetic."""
    ksize = KERNEL_SIZE // (SCALE_FACTOR ** layer_num)
    ksize = MIN_KERNEL_SIZE if ksize < MIN_KERNEL_SIZE else ksize
    dilation = 1
    padding = ((ksize - 1) * dilation - 1) // 2 - (SCALE_FACTOR - 1) // 2
    if ksize % 2 != 0:
        padding += 1
    return ksize, padding


# Static per-layer geometry (everything below is a compile-time constant).
CIN = [CHANNEL_LIST[l] for l in range(NETWORK_LEVELS)]
COUT = [CHANNEL_LIST[-1] if l == NETWORK_LEVELS - 1 else CHANNEL_LIST[l + 1]
        for l in range(NETWORK_LEVELS)]
KSIZE, PAD = zip(*[_layer_geometry(l) for l in range(NETWORK_LEVELS)])
L_IN = [LOWER_RESOLUTION * SCALE_FACTOR ** (NETWORK_LEVELS - l)
        for l in range(NETWORK_LEVELS + 1)]                     # 64, 32, 16, 8
LPAD = [L_IN[l] + 2 * PAD[l] for l in range(NETWORK_LEVELS)]    # padded lengths
LOUT = [(LPAD[l] - KSIZE[l]) // SCALE_FACTOR + 1 for l in range(NETWORK_LEVELS)]
for _l in range(NETWORK_LEVELS):
    assert LOUT[_l] == L_IN[_l + 1]
    # strided tap reads stay in bounds of the padded scratch
    assert KSIZE[_l] + SCALE_FACTOR * (LOUT[_l] - 1) <= LPAD[_l]
    if _l > 0:
        assert CIN[_l] == COUT[_l - 1]


# ------------------------------ fused Pallas kernel --------------------------
def _fused_disc_kernel(x_ref, w0_ref, b0_ref, w1_ref, b1_ref, w2_ref, b2_ref,
                       wl_ref, bl_ref, out_ref, a1_ref, a2_ref):
    """Entire discriminator forward, fully VMEM-resident.

    x_ref  : (B, LPAD[0], CIN[0])  pre-padded input, NLC layout
    wN_ref : (KSIZE[N], CIN[N], COUT[N])     bN_ref : (1, COUT[N])
    wl_ref : (1, LOWER_RESOLUTION, CHANNEL_LIST[-1])   bl_ref : (1, 1)
    out_ref: (8, 128)  lane-dense logit tile (logits at [:B, 0])
    a1/a2  : VMEM scratch holding the zero-padded inputs of layers 1 / 2
    """
    conv_w = (w0_ref, w1_ref, w2_ref)
    conv_b = (b0_ref, b1_ref, b2_ref)
    act_in = (x_ref, a1_ref, a2_ref)
    B = x_ref.shape[0]

    h = None
    for l in range(NETWORK_LEVELS):
        in_ref = act_in[l]
        w_ref = conv_w[l]
        b_ref = conv_b[l]
        lout, cin, cout = LOUT[l], CIN[l], COUT[l]

        # Conv1d(stride=2) as a sum over kernel taps; each tap is a strided
        # VMEM slice (in-kernel "im2col": no patch tensor, no HBM traffic).
        acc = jnp.zeros((B * lout, cout), jnp.float32)
        for k in range(KSIZE[l]):                                 # static unroll
            tap = in_ref[:, pl.ds(k, lout, stride=SCALE_FACTOR), :]  # (B,lout,cin)
            acc = acc + jnp.dot(tap.reshape(B * lout, cin), w_ref[k],
                                preferred_element_type=jnp.float32)
        acc = acc + b_ref[...]                                    # (1, cout)
        acc = jnp.maximum(acc, NEG_SLOPE * acc)                   # LeakyReLU, 1 VPU op
        h = acc.reshape(B, lout, cout)

        if l + 1 < NETWORK_LEVELS:
            # Store the activation, zero-padded for the next conv, into VMEM
            # scratch so the next layer's taps can again be strided ref slices.
            nxt = act_in[l + 1]
            nxt[...] = jnp.zeros_like(nxt)
            nxt[:, PAD[l + 1]:PAD[l + 1] + lout, :] = h

    # flatten + Linear(L*C -> 1): the linear weight was pre-permuted to the
    # kernel's (L, C) activation order, so the layer is an elementwise multiply
    # plus a full reduction (no skinny N=1 matmul, no tile-crossing reshape).
    prod = h * wl_ref[...]                                        # (B,L,C)*(1,L,C)
    s = jnp.sum(prod, axis=2, keepdims=True)                      # lane reduce
    logits = jnp.sum(s, axis=1) + bl_ref[...]                     # (B, 1)

    # Lane-dense (8, 128) output tile; logits live at [:B, 0], sliced outside.
    out_ref[...] = jnp.zeros_like(out_ref)
    out_ref[0:B, 0:1] = logits


# ------------------------------- forward wrapper ------------------------------
@jax.jit
def discriminator_forward(x, baked):
    """x: (B, num_channels, L) in NCL (PyTorch layout); returns (B, 1) float32."""
    B = x.shape[0]
    assert B <= 8, "output tile holds at most 8 logits"
    # Layout plumbing only (tiny, fused by XLA): NCL -> NLC + zero-pad for layer 0.
    x_nlc = jnp.transpose(x, (0, 2, 1)).astype(jnp.float32)
    x_pad = jnp.pad(x_nlc, ((0, 0), (PAD[0], PAD[0]), (0, 0)))

    n_inputs = 1 + 2 * NETWORK_LEVELS + 2
    vmem_spec = pl.BlockSpec(memory_space=pltpu.MemorySpace.VMEM)
    out_tile = pl.pallas_call(
        _fused_disc_kernel,
        out_shape=jax.ShapeDtypeStruct((8, 128), jnp.float32),
        in_specs=[vmem_spec] * n_inputs,
        out_specs=vmem_spec,
        scratch_shapes=[pltpu.VMEM((B, LPAD[l], CIN[l]), jnp.float32)
                        for l in range(1, NETWORK_LEVELS)],
    )(x_pad, *baked)
    return out_tile[:B, :1]


# -------------------------- parameters (torch layout) -------------------------
def init_params(key):
    """PyTorch-layout params: conv w (Cout,Cin,K) kaiming_normal-style, biases
    PyTorch-default uniform(+-1/sqrt(fan_in)); linear w (1, C_last*L_last)."""
    conv = []
    for l in range(NETWORK_LEVELS):
        key, kw, kb = jax.random.split(key, 3)
        fan_in = CIN[l] * KSIZE[l]
        w = jax.random.normal(kw, (COUT[l], CIN[l], KSIZE[l]), jnp.float32)
        w = w * (2.0 / fan_in) ** 0.5
        bound = 1.0 / fan_in ** 0.5
        b = jax.random.uniform(kb, (COUT[l],), jnp.float32, -bound, bound)
        conv.append((w, b))
    feat = LOWER_RESOLUTION * CHANNEL_LIST[-1]
    key, kw, kb = jax.random.split(key, 3)
    wl = jax.random.normal(kw, (1, feat), jnp.float32) * (2.0 / feat) ** 0.5
    bound = 1.0 / feat ** 0.5
    bl = jax.random.uniform(kb, (1,), jnp.float32, -bound, bound)
    return {"conv": conv, "linear": (wl, bl)}


def bake_params(params):
    """One-time re-layout of torch-layout params into the kernel layout
    (hoisted out of the forward path: pre-cast, pre-transposed, pre-permuted)."""
    baked = []
    for w, b in params["conv"]:
        baked.append(jnp.transpose(w, (2, 1, 0)).astype(jnp.float32))  # (K,Cin,Cout)
        baked.append(b.reshape(1, -1).astype(jnp.float32))             # (1,Cout)
    wl, bl = params["linear"]
    # torch.flatten of (B, C, L) is channel-major; the kernel activation is
    # (B, L, C), so permute the linear weight to (L, C) order once here.
    wl_lc = wl.reshape(CHANNEL_LIST[-1], LOWER_RESOLUTION).T[None]      # (1,L,C)
    baked.append(wl_lc.astype(jnp.float32))
    baked.append(bl.reshape(1, 1).astype(jnp.float32))
    return tuple(baked)


# ------------------------------ pure-JAX reference ----------------------------
def reference_forward(x, params):
    """Plain XLA implementation of the PyTorch module (for correctness check)."""
    h = x.astype(jnp.float32)
    for l, (w, b) in enumerate(params["conv"]):
        h = jax.lax.conv_general_dilated(
            h, w, window_strides=(SCALE_FACTOR,), padding=[(PAD[l], PAD[l])],
            dimension_numbers=("NCH", "OIH", "NCH"),
            precision=jax.lax.Precision.HIGHEST)
        h = h + b[None, :, None]
        h = jnp.where(h >= 0, h, NEG_SLOPE * h)
    flat = h.reshape(h.shape[0], -1)              # torch.flatten(x, start_dim=1)
    wl, bl = params["linear"]
    return jnp.dot(flat, wl.T, precision=jax.lax.Precision.HIGHEST) + bl[None, :]


# --------------------------------- main ---------------------------------------
if __name__ == "__main__":
    key = jax.random.PRNGKey(0)
    pkey, xkey = jax.random.split(key)
    params = init_params(pkey)
    baked = bake_params(params)

    B = 2
    L0 = LOWER_RESOLUTION * SCALE_FACTOR ** NETWORK_LEVELS     # 64
    x = jax.random.normal(xkey, (B, NUM_CHANNELS, L0), jnp.float32)

    out = discriminator_forward(x, baked)
    out = jax.block_until_ready(out)
    assert out.shape == (B, 1), out.shape
    assert out.dtype == jnp.float32

    ref = reference_forward(x, params)
    np.testing.assert_allclose(np.asarray(out), np.asarray(ref),
                               rtol=5e-2, atol=5e-2)
    print("KERNEL_OK")
</pallas_src>

<mosaic_0001>
module attributes {stable_mosaic.version = 11 : i64} {
  func.func @_fused_disc_kernel(%arg0: memref<2x78x2xf32, #tpu.memory_space<vmem>>, %arg1: memref<16x2x8xf32, #tpu.memory_space<vmem>>, %arg2: memref<1x8xf32, #tpu.memory_space<vmem>>, %arg3: memref<8x8x16xf32, #tpu.memory_space<vmem>>, %arg4: memref<1x16xf32, #tpu.memory_space<vmem>>, %arg5: memref<4x16x32xf32, #tpu.memory_space<vmem>>, %arg6: memref<1x32xf32, #tpu.memory_space<vmem>>, %arg7: memref<1x8x32xf32, #tpu.memory_space<vmem>>, %arg8: memref<1x1xf32, #tpu.memory_space<vmem>>, %arg9: memref<8x128xf32, #tpu.memory_space<vmem>>, %arg10: memref<2x38x8xf32, #tpu.memory_space<vmem>>, %arg11: memref<2x18x16xf32, #tpu.memory_space<vmem>>) attributes {dimension_semantics = [], scalar_prefetch = 0 : i64, scratch_operands = 2 : i64, tpu.core_type = #tpu.core_type<tc>} {
    %cst = arith.constant 0.000000e+00 : f32
    %0 = vector.broadcast %cst : f32 to vector<64x8xf32>
    %c0 = arith.constant 0 : index
    %c0_0 = arith.constant 0 : index
    %c0_1 = arith.constant 0 : index
    %1 = tpu.strided_load %arg0[%c0, %c0_0, %c0_1] {strides = array<i32: 1, 2, 1>} : memref<2x78x2xf32, #tpu.memory_space<vmem>>, vector<2x32x2xf32>
    %2 = vector.shape_cast %1 : vector<2x32x2xf32> to vector<64x2xf32>
    %c0_2 = arith.constant 0 : index
    %c0_3 = arith.constant 0 : index
    %c0_4 = arith.constant 0 : index
    %3 = vector.load %arg1[%c0_2, %c0_3, %c0_4] : memref<16x2x8xf32, #tpu.memory_space<vmem>>, vector<1x2x8xf32>
    %4 = vector.shape_cast %3 : vector<1x2x8xf32> to vector<2x8xf32>
    %cst_5 = arith.constant dense<0.000000e+00> : vector<64x8xf32>
    %5 = tpu.matmul %2, %4, %cst_5 {dimension_numbers = #tpu.dot_dimension_numbers<[1], [0], [0], [1], [0, 0, 1, 1], [], []>} : vector<64x2xf32>, vector<2x8xf32>, vector<64x8xf32> -> vector<64x8xf32>
    %6 = arith.addf %0, %5 : vector<64x8xf32>
    %c0_6 = arith.constant 0 : index
    %c1 = arith.constant 1 : index
    %c0_7 = arith.constant 0 : index
    %7 = tpu.strided_load %arg0[%c0_6, %c1, %c0_7] {strides = array<i32: 1, 2, 1>} : memref<2x78x2xf32, #tpu.memory_space<vmem>>, vector<2x32x2xf32>
    %8 = vector.shape_cast %7 : vector<2x32x2xf32> to vector<64x2xf32>
    %c1_8 = arith.constant 1 : index
    %c0_9 = arith.constant 0 : index
    %c0_10 = arith.constant 0 : index
    %9 = vector.load %arg1[%c1_8, %c0_9, %c0_10] : memref<16x2x8xf32, #tpu.memory_space<vmem>>, vector<1x2x8xf32>
    %10 = vector.shape_cast %9 : vector<1x2x8xf32> to vector<2x8xf32>
    %cst_11 = arith.constant dense<0.000000e+00> : vector<64x8xf32>
    %11 = tpu.matmul %8, %10, %cst_11 {dimension_numbers = #tpu.dot_dimension_numbers<[1], [0], [0], [1], [0, 0, 1, 1], [], []>} : vector<64x2xf32>, vector<2x8xf32>, vector<64x8xf32> -> vector<64x8xf32>
    %12 = arith.addf %6, %11 : vector<64x8xf32>
    %c0_12 = arith.constant 0 : index
    %c2 = arith.constant 2 : index
    %c0_13 = arith.constant 0 : index
    %13 = tpu.strided_load %arg0[%c0_12, %c2, %c0_13] {strides = array<i32: 1, 2, 1>} : memref<2x78x2xf32, #tpu.memory_space<vmem>>, vector<2x32x2xf32>
    %14 = vector.shape_cast %13 : vector<2x32x2xf32> to vector<64x2xf32>
    %c2_14 = arith.constant 2 : index
    %c0_15 = arith.constant 0 : index
    %c0_16 = arith.constant 0 : index
    %15 = vector.load %arg1[%c2_14, %c0_15, %c0_16] : memref<16x2x8xf32, #tpu.memory_space<vmem>>, vector<1x2x8xf32>
    %16 = vector.shape_cast %15 : vector<1x2x8xf32> to vector<2x8xf32>
    %cst_17 = arith.constant dense<0.000000e+00> : vector<64x8xf32>
    %17 = tpu.matmul %14, %16, %cst_17 {dimension_numbers = #tpu.dot_dimension_numbers<[1], [0], [0], [1], [0, 0, 1, 1], [], []>} : vector<64x2xf32>, vector<2x8xf32>, vector<64x8xf32> -> vector<64x8xf32>
    %18 = arith.addf %12, %17 : vector<64x8xf32>
    %c0_18 = arith.constant 0 : index
    %c3 = arith.constant 3 : index
    %c0_19 = arith.constant 0 : index
    %19 = tpu.strided_load %arg0[%c0_18, %c3, %c0_19] {strides = array<i32: 1, 2, 1>} : memref<2x78x2xf32, #tpu.memory_space<vmem>>, vector<2x32x2xf32>
    %20 = vector.shape_cast %19 : vector<2x32x2xf32> to vector<64x2xf32>
    %c3_20 = arith.constant 3 : index
    %c0_21 = arith.constant 0 : index
    %c0_22 = arith.constant 0 : index
    %21 = vector.load %arg1[%c3_20, %c0_21, %c0_22] : memref<16x2x8xf32, #tpu.memory_space<vmem>>, vector<1x2x8xf32>
    %22 = vector.shape_cast %21 : vector<1x2x8xf32> to vector<2x8xf32>
    %cst_23 = arith.constant dense<0.000000e+00> : vector<64x8xf32>
    %23 = tpu.matmul %20, %22, %cst_23 {dimension_numbers = #tpu.dot_dimension_numbers<[1], [0], [0], [1], [0, 0, 1, 1], [], []>} : vector<64x2xf32>, vector<2x8xf32>, vector<64x8xf32> -> vector<64x8xf32>
    %24 = arith.addf %18, %23 : vector<64x8xf32>
    %c0_24 = arith.constant 0 : index
    %c4 = arith.constant 4 : index
    %c0_25 = arith.constant 0 : index
    %25 = tpu.strided_load %arg0[%c0_24, %c4, %c0_25] {strides = array<i32: 1, 2, 1>} : memref<2x78x2xf32, #tpu.memory_space<vmem>>, vector<2x32x2xf32>
    %26 = vector.shape_cast %25 : vector<2x32x2xf32> to vector<64x2xf32>
    %c4_26 = arith.constant 4 : index
    %c0_27 = arith.constant 0 : index
    %c0_28 = arith.constant 0 : index
    %27 = vector.load %arg1[%c4_26, %c0_27, %c0_28] : memref<16x2x8xf32, #tpu.memory_space<vmem>>, vector<1x2x8xf32>
    %28 = vector.shape_cast %27 : vector<1x2x8xf32> to vector<2x8xf32>
    %cst_29 = arith.constant dense<0.000000e+00> : vector<64x8xf32>
    %29 = tpu.matmul %26, %28, %cst_29 {dimension_numbers = #tpu.dot_dimension_numbers<[1], [0], [0], [1], [0, 0, 1, 1], [], []>} : vector<64x2xf32>, vector<2x8xf32>, vector<64x8xf32> -> vector<64x8xf32>
    %30 = arith.addf %24, %29 : vector<64x8xf32>
    %c0_30 = arith.constant 0 : index
    %c5 = arith.constant 5 : index
    %c0_31 = arith.constant 0 : index
    %31 = tpu.strided_load %arg0[%c0_30, %c5, %c0_31] {strides = array<i32: 1, 2, 1>} : memref<2x78x2xf32, #tpu.memory_space<vmem>>, vector<2x32x2xf32>
    %32 = vector.shape_cast %31 : vector<2x32x2xf32> to vector<64x2xf32>
    %c5_32 = arith.constant 5 : index
    %c0_33 = arith.constant 0 : index
    %c0_34 = arith.constant 0 : index
    %33 = vector.load %arg1[%c5_32, %c0_33, %c0_34] : memref<16x2x8xf32, #tpu.memory_space<vmem>>, vector<1x2x8xf32>
    %34 = vector.shape_cast %33 : vector<1x2x8xf32> to vector<2x8xf32>
    %cst_35 = arith.constant dense<0.000000e+00> : vector<64x8xf32>
    %35 = tpu.matmul %32, %34, %cst_35 {dimension_numbers = #tpu.dot_dimension_numbers<[1], [0], [0], [1], [0, 0, 1, 1], [], []>} : vector<64x2xf32>, vector<2x8xf32>, vector<64x8xf32> -> vector<64x8xf32>
    %36 = arith.addf %30, %35 : vector<64x8xf32>
    %c0_36 = arith.constant 0 : index
    %c6 = arith.constant 6 : index
    %c0_37 = arith.constant 0 : index
    %37 = tpu.strided_load %arg0[%c0_36, %c6, %c0_37] {strides = array<i32: 1, 2, 1>} : memref<2x78x2xf32, #tpu.memory_space<vmem>>, vector<2x32x2xf32>
    %38 = vector.shape_cast %37 : vector<2x32x2xf32> to vector<64x2xf32>
    %c6_38 = arith.constant 6 : index
    %c0_39 = arith.constant 0 : index
    %c0_40 = arith.constant 0 : index
    %39 = vector.load %arg1[%c6_38, %c0_39, %c0_40] : memref<16x2x8xf32, #tpu.memory_space<vmem>>, vector<1x2x8xf32>
    %40 = vector.shape_cast %39 : vector<1x2x8xf32> to vector<2x8xf32>
    %cst_41 = arith.constant dense<0.000000e+00> : vector<64x8xf32>
    %41 = tpu.matmul %38, %40, %cst_41 {dimension_numbers = #tpu.dot_dimension_numbers<[1], [0], [0], [1], [0, 0, 1, 1], [], []>} : vector<64x2xf32>, vector<2x8xf32>, vector<64x8xf32> -> vector<64x8xf32>
    %42 = arith.addf %36, %41 : vector<64x8xf32>
    %c0_42 = arith.constant 0 : index
    %c7 = arith.constant 7 : index
    %c0_43 = arith.constant 0 : index
    %43 = tpu.strided_load %arg0[%c0_42, %c7, %c0_43] {strides = array<i32: 1, 2, 1>} : memref<2x78x2xf32, #tpu.memory_space<vmem>>, vector<2x32x2xf32>
    %44 = vector.shape_cast %43 : vector<2x32x2xf32> to vector<64x2xf32>
    %c7_44 = arith.constant 7 : index
    %c0_45 = arith.constant 0 : index
    %c0_46 = arith.constant 0 : index
    %45 = vector.load %arg1[%c7_44, %c0_45, %c0_46] : memref<16x2x8xf32, #tpu.memory_space<vmem>>, vector<1x2x8xf32>
    %46 = vector.shape_cast %45 : vector<1x2x8xf32> to vector<2x8xf32>
    %cst_47 = arith.constant dense<0.000000e+00> : vector<64x8xf32>
    %47 = tpu.matmul %44, %46, %cst_47 {dimension_numbers = #tpu.dot_dimension_numbers<[1], [0], [0], [1], [0, 0, 1, 1], [], []>} : vector<64x2xf32>, vector<2x8xf32>, vector<64x8xf32> -> vector<64x8xf32>
    %48 = arith.addf %42, %47 : vector<64x8xf32>
    %c0_48 = arith.constant 0 : index
    %c8 = arith.constant 8 : index
    %c0_49 = arith.constant 0 : index
    %49 = tpu.strided_load %arg0[%c0_48, %c8, %c0_49] {strides = array<i32: 1, 2, 1>} : memref<2x78x2xf32, #tpu.memory_space<vmem>>, vector<2x32x2xf32>
    %50 = vector.shape_cast %49 : vector<2x32x2xf32> to vector<64x2xf32>
    %c8_50 = arith.constant 8 : index
    %c0_51 = arith.constant 0 : index
    %c0_52 = arith.constant 0 : index
    %51 = vector.load %arg1[%c8_50, %c0_51, %c0_52] : memref<16x2x8xf32, #tpu.memory_space<vmem>>, vector<1x2x8xf32>
    %52 = vector.shape_cast %51 : vector<1x2x8xf32> to vector<2x8xf32>
    %cst_53 = arith.constant dense<0.000000e+00> : vector<64x8xf32>
    %53 = tpu.matmul %50, %52, %cst_53 {dimension_numbers = #tpu.dot_dimension_numbers<[1], [0], [0], [1], [0, 0, 1, 1], [], []>} : vector<64x2xf32>, vector<2x8xf32>, vector<64x8xf32> -> vector<64x8xf32>
    %54 = arith.addf %48, %53 : vector<64x8xf32>
    %c0_54 = arith.constant 0 : index
    %c9 = arith.constant 9 : index
    %c0_55 = arith.constant 0 : index
    %55 = tpu.strided_load %arg0[%c0_54, %c9, %c0_55] {strides = array<i32: 1, 2, 1>} : memref<2x78x2xf32, #tpu.memory_space<vmem>>, vector<2x32x2xf32>
    %56 = vector.shape_cast %55 : vector<2x32x2xf32> to vector<64x2xf32>
    %c9_56 = arith.constant 9 : index
    %c0_57 = arith.constant 0 : index
    %c0_58 = arith.constant 0 : index
    %57 = vector.load %arg1[%c9_56, %c0_57, %c0_58] : memref<16x2x8xf32, #tpu.memory_space<vmem>>, vector<1x2x8xf32>
    %58 = vector.shape_cast %57 : vector<1x2x8xf32> to vector<2x8xf32>
    %cst_59 = arith.constant dense<0.000000e+00> : vector<64x8xf32>
    %59 = tpu.matmul %56, %58, %cst_59 {dimension_numbers = #tpu.dot_dimension_numbers<[1], [0], [0], [1], [0, 0, 1, 1], [], []>} : vector<64x2xf32>, vector<2x8xf32>, vector<64x8xf32> -> vector<64x8xf32>
    %60 = arith.addf %54, %59 : vector<64x8xf32>
    %c0_60 = arith.constant 0 : index
    %c10 = arith.constant 10 : index
    %c0_61 = arith.constant 0 : index
    %61 = tpu.strided_load %arg0[%c0_60, %c10, %c0_61] {strides = array<i32: 1, 2, 1>} : memref<2x78x2xf32, #tpu.memory_space<vmem>>, vector<2x32x2xf32>
    %62 = vector.shape_cast %61 : vector<2x32x2xf32> to vector<64x2xf32>
    %c10_62 = arith.constant 10 : index
    %c0_63 = arith.constant 0 : index
    %c0_64 = arith.constant 0 : index
    %63 = vector.load %arg1[%c10_62, %c0_63, %c0_64] : memref<16x2x8xf32, #tpu.memory_space<vmem>>, vector<1x2x8xf32>
    %64 = vector.shape_cast %63 : vector<1x2x8xf32> to vector<2x8xf32>
    %cst_65 = arith.constant dense<0.000000e+00> : vector<64x8xf32>
    %65 = tpu.matmul %62, %64, %cst_65 {dimension_numbers = #tpu.dot_dimension_numbers<[1], [0], [0], [1], [0, 0, 1, 1], [], []>} : vector<64x2xf32>, vector<2x8xf32>, vector<64x8xf32> -> vector<64x8xf32>
    %66 = arith.addf %60, %65 : vector<64x8xf32>
    %c0_66 = arith.constant 0 : index
    %c11 = arith.constant 11 : index
    %c0_67 = arith.constant 0 : index
    %67 = tpu.strided_load %arg0[%c0_66, %c11, %c0_67] {strides = array<i32: 1, 2, 1>} : memref<2x78x2xf32, #tpu.memory_space<vmem>>, vector<2x32x2xf32>
    %68 = vector.shape_cast %67 : vector<2x32x2xf32> to vector<64x2xf32>
    %c11_68 = arith.constant 11 : index
    %c0_69 = arith.constant 0 : index
    %c0_70 = arith.constant 0 : index
    %69 = vector.load %arg1[%c11_68, %c0_69, %c0_70] : memref<16x2x8xf32, #tpu.memory_space<vmem>>, vector<1x2x8xf32>
    %70 = vector.shape_cast %69 : vector<1x2x8xf32> to vector<2x8xf32>
    %cst_71 = arith.constant dense<0.000000e+00> : vector<64x8xf32>
    %71 = tpu.matmul %68, %70, %cst_71 {dimension_numbers = #tpu.dot_dimension_numbers<[1], [0], [0], [1], [0, 0, 1, 1], [], []>} : vector<64x2xf32>, vector<2x8xf32>, vector<64x8xf32> -> vector<64x8xf32>
    %72 = arith.addf %66, %71 : vector<64x8xf32>
    %c0_72 = arith.constant 0 : index
    %c12 = arith.constant 12 : index
    %c0_73 = arith.constant 0 : index
    %73 = tpu.strided_load %arg0[%c0_72, %c12, %c0_73] {strides = array<i32: 1, 2, 1>} : memref<2x78x2xf32, #tpu.memory_space<vmem>>, vector<2x32x2xf32>
    %74 = vector.shape_cast %73 : vector<2x32x2xf32> to vector<64x2xf32>
    %c12_74 = arith.constant 12 : index
    %c0_75 = arith.constant 0 : index
    %c0_76 = arith.constant 0 : index
    %75 = vector.load %arg1[%c12_74, %c0_75, %c0_76] : memref<16x2x8xf32, #tpu.memory_space<vmem>>, vector<1x2x8xf32>
    %76 = vector.shape_cast %75 : vector<1x2x8xf32> to vector<2x8xf32>
    %cst_77 = arith.constant dense<0.000000e+00> : vector<64x8xf32>
    %77 = tpu.matmul %74, %76, %cst_77 {dimension_numbers = #tpu.dot_dimension_numbers<[1], [0], [0], [1], [0, 0, 1, 1], [], []>} : vector<64x2xf32>, vector<2x8xf32>, vector<64x8xf32> -> vector<64x8xf32>
    %78 = arith.addf %72, %77 : vector<64x8xf32>
    %c0_78 = arith.constant 0 : index
    %c13 = arith.constant 13 : index
    %c0_79 = arith.constant 0 : index
    %79 = tpu.strided_load %arg0[%c0_78, %c13, %c0_79] {strides = array<i32: 1, 2, 1>} : memref<2x78x2xf32, #tpu.memory_space<vmem>>, vector<2x32x2xf32>
    %80 = vector.shape_cast %79 : vector<2x32x2xf32> to vector<64x2xf32>
    %c13_80 = arith.constant 13 : index
    %c0_81 = arith.constant 0 : index
    %c0_82 = arith.constant 0 : index
    %81 = vector.load %arg1[%c13_80, %c0_81, %c0_82] : memref<16x2x8xf32, #tpu.memory_space<vmem>>, vector<1x2x8xf32>
    %82 = vector.shape_cast %81 : vector<1x2x8xf32> to vector<2x8xf32>
    %cst_83 = arith.constant dense<0.000000e+00> : vector<64x8xf32>
    %83 = tpu.matmul %80, %82, %cst_83 {dimension_numbers = #tpu.dot_dimension_numbers<[1], [0], [0], [1], [0, 0, 1, 1], [], []>} : vector<64x2xf32>, vector<2x8xf32>, vector<64x8xf32> -> vector<64x8xf32>
    %84 = arith.addf %78, %83 : vector<64x8xf32>
    %c0_84 = arith.constant 0 : index
    %c14 = arith.constant 14 : index
    %c0_85 = arith.constant 0 : index
    %85 = tpu.strided_load %arg0[%c0_84, %c14, %c0_85] {strides = array<i32: 1, 2, 1>} : memref<2x78x2xf32, #tpu.memory_space<vmem>>, vector<2x32x2xf32>
    %86 = vector.shape_cast %85 : vector<2x32x2xf32> to vector<64x2xf32>
    %c14_86 = arith.constant 14 : index
    %c0_87 = arith.constant 0 : index
    %c0_88 = arith.constant 0 : index
    %87 = vector.load %arg1[%c14_86, %c0_87, %c0_88] : memref<16x2x8xf32, #tpu.memory_space<vmem>>, vector<1x2x8xf32>
    %88 = vector.shape_cast %87 : vector<1x2x8xf32> to vector<2x8xf32>
    %cst_89 = arith.constant dense<0.000000e+00> : vector<64x8xf32>
    %89 = tpu.matmul %86, %88, %cst_89 {dimension_numbers = #tpu.dot_dimension_numbers<[1], [0], [0], [1], [0, 0, 1, 1], [], []>} : vector<64x2xf32>, vector<2x8xf32>, vector<64x8xf32> -> vector<64x8xf32>
    %90 = arith.addf %84, %89 : vector<64x8xf32>
    %c0_90 = arith.constant 0 : index
    %c15 = arith.constant 15 : index
    %c0_91 = arith.constant 0 : index
    %91 = tpu.strided_load %arg0[%c0_90, %c15, %c0_91] {strides = array<i32: 1, 2, 1>} : memref<2x78x2xf32, #tpu.memory_space<vmem>>, vector<2x32x2xf32>
    %92 = vector.shape_cast %91 : vector<2x32x2xf32> to vector<64x2xf32>
    %c15_92 = arith.constant 15 : index
    %c0_93 = arith.constant 0 : index
    %c0_94 = arith.constant 0 : index
    %93 = vector.load %arg1[%c15_92, %c0_93, %c0_94] : memref<16x2x8xf32, #tpu.memory_space<vmem>>, vector<1x2x8xf32>
    %94 = vector.shape_cast %93 : vector<1x2x8xf32> to vector<2x8xf32>
    %cst_95 = arith.constant dense<0.000000e+00> : vector<64x8xf32>
    %95 = tpu.matmul %92, %94, %cst_95 {dimension_numbers = #tpu.dot_dimension_numbers<[1], [0], [0], [1], [0, 0, 1, 1], [], []>} : vector<64x2xf32>, vector<2x8xf32>, vector<64x8xf32> -> vector<64x8xf32>
    %96 = arith.addf %90, %95 : vector<64x8xf32>
    %c0_96 = arith.constant 0 : index
    %c0_97 = arith.constant 0 : index
    %97 = vector.load %arg2[%c0_96, %c0_97] : memref<1x8xf32, #tpu.memory_space<vmem>>, vector<1x8xf32>
    %98 = vector.broadcast %97 : vector<1x8xf32> to vector<64x8xf32>
    %99 = arith.addf %96, %98 : vector<64x8xf32>
    %cst_98 = arith.constant 2.000000e-01 : f32
    %100 = vector.broadcast %cst_98 : f32 to vector<64x8xf32>
    %101 = arith.mulf %100, %99 : vector<64x8xf32>
    %102 = arith.maximumf %99, %101 : vector<64x8xf32>
    %103 = vector.shape_cast %102 : vector<64x8xf32> to vector<2x32x8xf32>
    %cst_99 = arith.constant 0.000000e+00 : f32
    %104 = vector.broadcast %cst_99 : f32 to vector<2x38x8xf32>
    %c0_100 = arith.constant 0 : index
    %c0_101 = arith.constant 0 : index
    %c0_102 = arith.constant 0 : index
    %105 = vector.load %arg10[%c0_100, %c0_101, %c0_102] : memref<2x38x8xf32, #tpu.memory_space<vmem>>, vector<2x38x8xf32>
    tpu.vector_store %arg10[%c0_100, %c0_101, %c0_102], %104 {strides = array<i32>} : memref<2x38x8xf32, #tpu.memory_space<vmem>>, vector<2x38x8xf32>,
    %c0_103 = arith.constant 0 : index
    %c3_104 = arith.constant 3 : index
    %c0_105 = arith.constant 0 : index
    %106 = vector.load %arg10[%c0_103, %c3_104, %c0_105] : memref<2x38x8xf32, #tpu.memory_space<vmem>>, vector<2x32x8xf32>
    tpu.vector_store %arg10[%c0_103, %c3_104, %c0_105], %103 {strides = array<i32>} : memref<2x38x8xf32, #tpu.memory_space<vmem>>, vector<2x32x8xf32>,
    %cst_106 = arith.constant 0.000000e+00 : f32
    %107 = vector.broadcast %cst_106 : f32 to vector<32x16xf32>
    %c0_107 = arith.constant 0 : index
    %c0_108 = arith.constant 0 : index
    %c0_109 = arith.constant 0 : index
    %108 = tpu.strided_load %arg10[%c0_107, %c0_108, %c0_109] {strides = array<i32: 1, 2, 1>} : memref<2x38x8xf32, #tpu.memory_space<vmem>>, vector<2x16x8xf32>
    %109 = vector.shape_cast %108 : vector<2x16x8xf32> to vector<32x8xf32>
    %c0_110 = arith.constant 0 : index
    %c0_111 = arith.constant 0 : index
    %c0_112 = arith.constant 0 : index
    %110 = vector.load %arg3[%c0_110, %c0_111, %c0_112] : memref<8x8x16xf32, #tpu.memory_space<vmem>>, vector<1x8x16xf32>
    %111 = vector.shape_cast %110 : vector<1x8x16xf32> to vector<8x16xf32>
    %cst_113 = arith.constant dense<0.000000e+00> : vector<32x16xf32>
    %112 = tpu.matmul %109, %111, %cst_113 {dimension_numbers = #tpu.dot_dimension_numbers<[1], [0], [0], [1], [0, 0, 1, 1], [], []>} : vector<32x8xf32>, vector<8x16xf32>, vector<32x16xf32> -> vector<32x16xf32>
    %113 = arith.addf %107, %112 : vector<32x16xf32>
    %c0_114 = arith.constant 0 : index
    %c1_115 = arith.constant 1 : index
    %c0_116 = arith.constant 0 : index
    %114 = tpu.strided_load %arg10[%c0_114, %c1_115, %c0_116] {strides = array<i32: 1, 2, 1>} : memref<2x38x8xf32, #tpu.memory_space<vmem>>, vector<2x16x8xf32>
    %115 = vector.shape_cast %114 : vector<2x16x8xf32> to vector<32x8xf32>
    %c1_117 = arith.constant 1 : index
    %c0_118 = arith.constant 0 : index
    %c0_119 = arith.constant 0 : index
    %116 = vector.load %arg3[%c1_117, %c0_118, %c0_119] : memref<8x8x16xf32, #tpu.memory_space<vmem>>, vector<1x8x16xf32>
    %117 = vector.shape_cast %116 : vector<1x8x16xf32> to vector<8x16xf32>
    %cst_120 = arith.constant dense<0.000000e+00> : vector<32x16xf32>
    %118 = tpu.matmul %115, %117, %cst_120 {dimension_numbers = #tpu.dot_dimension_numbers<[1], [0], [0], [1], [0, 0, 1, 1], [], []>} : vector<32x8xf32>, vector<8x16xf32>, vector<32x16xf32> -> vector<32x16xf32>
    %119 = arith.addf %113, %118 : vector<32x16xf32>
    %c0_121 = arith.constant 0 : index
    %c2_122 = arith.constant 2 : index
    %c0_123 = arith.constant 0 : index
    %120 = tpu.strided_load %arg10[%c0_121, %c2_122, %c0_123] {strides = array<i32: 1, 2, 1>} : memref<2x38x8xf32, #tpu.memory_space<vmem>>, vector<2x16x8xf32>
    %121 = vector.shape_cast %120 : vector<2x16x8xf32> to vector<32x8xf32>
    %c2_124 = arith.constant 2 : index
    %c0_125 = arith.constant 0 : index
    %c0_126 = arith.constant 0 : index
    %122 = vector.load %arg3[%c2_124, %c0_125, %c0_126] : memref<8x8x16xf32, #tpu.memory_space<vmem>>, vector<1x8x16xf32>
    %123 = vector.shape_cast %122 : vector<1x8x16xf32> to vector<8x16xf32>
    %cst_127 = arith.constant dense<0.000000e+00> : vector<32x16xf32>
    %124 = tpu.matmul %121, %123, %cst_127 {dimension_numbers = #tpu.dot_dimension_numbers<[1], [0], [0], [1], [0, 0, 1, 1], [], []>} : vector<32x8xf32>, vector<8x16xf32>, vector<32x16xf32> -> vector<32x16xf32>
    %125 = arith.addf %119, %124 : vector<32x16xf32>
    %c0_128 = arith.constant 0 : index
    %c3_129 = arith.constant 3 : index
    %c0_130 = arith.constant 0 : index
    %126 = tpu.strided_load %arg10[%c0_128, %c3_129, %c0_130] {strides = array<i32: 1, 2, 1>} : memref<2x38x8xf32, #tpu.memory_space<vmem>>, vector<2x16x8xf32>
    %127 = vector.shape_cast %126 : vector<2x16x8xf32> to vector<32x8xf32>
    %c3_131 = arith.constant 3 : index
    %c0_132 = arith.constant 0 : index
    %c0_133 = arith.constant 0 : index
    %128 = vector.load %arg3[%c3_131, %c0_132, %c0_133] : memref<8x8x16xf32, #tpu.memory_space<vmem>>, vector<1x8x16xf32>
    %129 = vector.shape_cast %128 : vector<1x8x16xf32> to vector<8x16xf32>
    %cst_134 = arith.constant dense<0.000000e+00> : vector<32x16xf32>
    %130 = tpu.matmul %127, %129, %cst_134 {dimension_numbers = #tpu.dot_dimension_numbers<[1], [0], [0], [1], [0, 0, 1, 1], [], []>} : vector<32x8xf32>, vector<8x16xf32>, vector<32x16xf32> -> vector<32x16xf32>
    %131 = arith.addf %125, %130 : vector<32x16xf32>
    %c0_135 = arith.constant 0 : index
    %c4_136 = arith.constant 4 : index
    %c0_137 = arith.constant 0 : index
    %132 = tpu.strided_load %arg10[%c0_135, %c4_136, %c0_137] {strides = array<i32: 1, 2, 1>} : memref<2x38x8xf32, #tpu.memory_space<vmem>>, vector<2x16x8xf32>
    %133 = vector.shape_cast %132 : vector<2x16x8xf32> to vector<32x8xf32>
    %c4_138 = arith.constant 4 : index
    %c0_139 = arith.constant 0 : index
    %c0_140 = arith.constant 0 : index
    %134 = vector.load %arg3[%c4_138, %c0_139, %c0_140] : memref<8x8x16xf32, #tpu.memory_space<vmem>>, vector<1x8x16xf32>
    %135 = vector.shape_cast %134 : vector<1x8x16xf32> to vector<8x16xf32>
    %cst_141 = arith.constant dense<0.000000e+00> : vector<32x16xf32>
    %136 = tpu.matmul %133, %135, %cst_141 {dimension_numbers = #tpu.dot_dimension_numbers<[1], [0], [0], [1], [0, 0, 1, 1], [], []>} : vector<32x8xf32>, vector<8x16xf32>, vector<32x16xf32> -> vector<32x16xf32>
    %137 = arith.addf %131, %136 : vector<32x16xf32>
    %c0_142 = arith.constant 0 : index
    %c5_143 = arith.constant 5 : index
    %c0_144 = arith.constant 0 : index
    %138 = tpu.strided_load %arg10[%c0_142, %c5_143, %c0_144] {strides = array<i32: 1, 2, 1>} : memref<2x38x8xf32, #tpu.memory_space<vmem>>, vector<2x16x8xf32>
    %139 = vector.shape_cast %138 : vector<2x16x8xf32> to vector<32x8xf32>
    %c5_145 = arith.constant 5 : index
    %c0_146 = arith.constant 0 : index
    %c0_147 = arith.constant 0 : index
    %140 = vector.load %arg3[%c5_145, %c0_146, %c0_147] : memref<8x8x16xf32, #tpu.memory_space<vmem>>, vector<1x8x16xf32>
    %141 = vector.shape_cast %140 : vector<1x8x16xf32> to vector<8x16xf32>
    %cst_148 = arith.constant dense<0.000000e+00> : vector<32x16xf32>
    %142 = tpu.matmul %139, %141, %cst_148 {dimension_numbers = #tpu.dot_dimension_numbers<[1], [0], [0], [1], [0, 0, 1, 1], [], []>} : vector<32x8xf32>, vector<8x16xf32>, vector<32x16xf32> -> vector<32x16xf32>
    %143 = arith.addf %137, %142 : vector<32x16xf32>
    %c0_149 = arith.constant 0 : index
    %c6_150 = arith.constant 6 : index
    %c0_151 = arith.constant 0 : index
    %144 = tpu.strided_load %arg10[%c0_149, %c6_150, %c0_151] {strides = array<i32: 1, 2, 1>} : memref<2x38x8xf32, #tpu.memory_space<vmem>>, vector<2x16x8xf32>
    %145 = vector.shape_cast %144 : vector<2x16x8xf32> to vector<32x8xf32>
    %c6_152 = arith.constant 6 : index
    %c0_153 = arith.constant 0 : index
    %c0_154 = arith.constant 0 : index
    %146 = vector.load %arg3[%c6_152, %c0_153, %c0_154] : memref<8x8x16xf32, #tpu.memory_space<vmem>>, vector<1x8x16xf32>
    %147 = vector.shape_cast %146 : vector<1x8x16xf32> to vector<8x16xf32>
    %cst_155 = arith.constant dense<0.000000e+00> : vector<32x16xf32>
    %148 = tpu.matmul %145, %147, %cst_155 {dimension_numbers = #tpu.dot_dimension_numbers<[1], [0], [0], [1], [0, 0, 1, 1], [], []>} : vector<32x8xf32>, vector<8x16xf32>, vector<32x16xf32> -> vector<32x16xf32>
    %149 = arith.addf %143, %148 : vector<32x16xf32>
    %c0_156 = arith.constant 0 : index
    %c7_157 = arith.constant 7 : index
    %c0_158 = arith.constant 0 : index
    %150 = tpu.strided_load %arg10[%c0_156, %c7_157, %c0_158] {strides = array<i32: 1, 2, 1>} : memref<2x38x8xf32, #tpu.memory_space<vmem>>, vector<2x16x8xf32>
    %151 = vector.shape_cast %150 : vector<2x16x8xf32> to vector<32x8xf32>
    %c7_159 = arith.constant 7 : index
    %c0_160 = arith.constant 0 : index
    %c0_161 = arith.constant 0 : index
    %152 = vector.load %arg3[%c7_159, %c0_160, %c0_161] : memref<8x8x16xf32, #tpu.memory_space<vmem>>, vector<1x8x16xf32>
    %153 = vector.shape_cast %152 : vector<1x8x16xf32> to vector<8x16xf32>
    %cst_162 = arith.constant dense<0.000000e+00> : vector<32x16xf32>
    %154 = tpu.matmul %151, %153, %cst_162 {dimension_numbers = #tpu.dot_dimension_numbers<[1], [0], [0], [1], [0, 0, 1, 1], [], []>} : vector<32x8xf32>, vector<8x16xf32>, vector<32x16xf32> -> vector<32x16xf32>
    %155 = arith.addf %149, %154 : vector<32x16xf32>
    %c0_163 = arith.constant 0 : index
    %c0_164 = arith.constant 0 : index
    %156 = vector.load %arg4[%c0_163, %c0_164] : memref<1x16xf32, #tpu.memory_space<vmem>>, vector<1x16xf32>
    %157 = vector.broadcast %156 : vector<1x16xf32> to vector<32x16xf32>
    %158 = arith.addf %155, %157 : vector<32x16xf32>
    %cst_165 = arith.constant 2.000000e-01 : f32
    %159 = vector.broadcast %cst_165 : f32 to vector<32x16xf32>
    %160 = arith.mulf %159, %158 : vector<32x16xf32>
    %161 = arith.maximumf %158, %160 : vector<32x16xf32>
    %162 = vector.shape_cast %161 : vector<32x16xf32> to vector<2x16x16xf32>
    %cst_166 = arith.constant 0.000000e+00 : f32
    %163 = vector.broadcast %cst_166 : f32 to vector<2x18x16xf32>
    %c0_167 = arith.constant 0 : index
    %c0_168 = arith.constant 0 : index
    %c0_169 = arith.constant 0 : index
    %164 = vector.load %arg11[%c0_167, %c0_168, %c0_169] : memref<2x18x16xf32, #tpu.memory_space<vmem>>, vector<2x18x16xf32>
    tpu.vector_store %arg11[%c0_167, %c0_168, %c0_169], %163 {strides = array<i32>} : memref<2x18x16xf32, #tpu.memory_space<vmem>>, vector<2x18x16xf32>,
    %c0_170 = arith.constant 0 : index
    %c1_171 = arith.constant 1 : index
    %c0_172 = arith.constant 0 : index
    %165 = vector.load %arg11[%c0_170, %c1_171, %c0_172] : memref<2x18x16xf32, #tpu.memory_space<vmem>>, vector<2x16x16xf32>
    tpu.vector_store %arg11[%c0_170, %c1_171, %c0_172], %162 {strides = array<i32>} : memref<2x18x16xf32, #tpu.memory_space<vmem>>, vector<2x16x16xf32>,
    %cst_173 = arith.constant 0.000000e+00 : f32
    %166 = vector.broadcast %cst_173 : f32 to vector<16x32xf32>
    %c0_174 = arith.constant 0 : index
    %c0_175 = arith.constant 0 : index
    %c0_176 = arith.constant 0 : index
    %167 = tpu.strided_load %arg11[%c0_174, %c0_175, %c0_176] {strides = array<i32: 1, 2, 1>} : memref<2x18x16xf32, #tpu.memory_space<vmem>>, vector<2x8x16xf32>
    %168 = vector.shape_cast %167 : vector<2x8x16xf32> to vector<16x16xf32>
    %c0_177 = arith.constant 0 : index
    %c0_178 = arith.constant 0 : index
    %c0_179 = arith.constant 0 : index
    %169 = vector.load %arg5[%c0_177, %c0_178, %c0_179] : memref<4x16x32xf32, #tpu.memory_space<vmem>>, vector<1x16x32xf32>
    %170 = vector.shape_cast %169 : vector<1x16x32xf32> to vector<16x32xf32>
    %cst_180 = arith.constant dense<0.000000e+00> : vector<16x32xf32>
    %171 = tpu.matmul %168, %170, %cst_180 {dimension_numbers = #tpu.dot_dimension_numbers<[1], [0], [0], [1], [0, 0, 1, 1], [], []>} : vector<16x16xf32>, vector<16x32xf32>, vector<16x32xf32> -> vector<16x32xf32>
    %172 = arith.addf %166, %171 : vector<16x32xf32>
    %c0_181 = arith.constant 0 : index
    %c1_182 = arith.constant 1 : index
    %c0_183 = arith.constant 0 : index
    %173 = tpu.strided_load %arg11[%c0_181, %c1_182, %c0_183] {strides = array<i32: 1, 2, 1>} : memref<2x18x16xf32, #tpu.memory_space<vmem>>, vector<2x8x16xf32>
    %174 = vector.shape_cast %173 : vector<2x8x16xf32> to vector<16x16xf32>
    %c1_184 = arith.constant 1 : index
    %c0_185 = arith.constant 0 : index
    %c0_186 = arith.constant 0 : index
    %175 = vector.load %arg5[%c1_184, %c0_185, %c0_186] : memref<4x16x32xf32, #tpu.memory_space<vmem>>, vector<1x16x32xf32>
    %176 = vector.shape_cast %175 : vector<1x16x32xf32> to vector<16x32xf32>
    %cst_187 = arith.constant dense<0.000000e+00> : vector<16x32xf32>
    %177 = tpu.matmul %174, %176, %cst_187 {dimension_numbers = #tpu.dot_dimension_numbers<[1], [0], [0], [1], [0, 0, 1, 1], [], []>} : vector<16x16xf32>, vector<16x32xf32>, vector<16x32xf32> -> vector<16x32xf32>
    %178 = arith.addf %172, %177 : vector<16x32xf32>
    %c0_188 = arith.constant 0 : index
    %c2_189 = arith.constant 2 : index
    %c0_190 = arith.constant 0 : index
    %179 = tpu.strided_load %arg11[%c0_188, %c2_189, %c0_190] {strides = array<i32: 1, 2, 1>} : memref<2x18x16xf32, #tpu.memory_space<vmem>>, vector<2x8x16xf32>
    %180 = vector.shape_cast %179 : vector<2x8x16xf32> to vector<16x16xf32>
    %c2_191 = arith.constant 2 : index
    %c0_192 = arith.constant 0 : index
    %c0_193 = arith.constant 0 : index
    %181 = vector.load %arg5[%c2_191, %c0_192, %c0_193] : memref<4x16x32xf32, #tpu.memory_space<vmem>>, vector<1x16x32xf32>
    %182 = vector.shape_cast %181 : vector<1x16x32xf32> to vector<16x32xf32>
    %cst_194 = arith.constant dense<0.000000e+00> : vector<16x32xf32>
    %183 = tpu.matmul %180, %182, %cst_194 {dimension_numbers = #tpu.dot_dimension_numbers<[1], [0], [0], [1], [0, 0, 1, 1], [], []>} : vector<16x16xf32>, vector<16x32xf32>, vector<16x32xf32> -> vector<16x32xf32>
    %184 = arith.addf %178, %183 : vector<16x32xf32>
    %c0_195 = arith.constant 0 : index
    %c3_196 = arith.constant 3 : index
    %c0_197 = arith.constant 0 : index
    %185 = tpu.strided_load %arg11[%c0_195, %c3_196, %c0_197] {strides = array<i32: 1, 2, 1>} : memref<2x18x16xf32, #tpu.memory_space<vmem>>, vector<2x8x16xf32>
    %186 = vector.shape_cast %185 : vector<2x8x16xf32> to vector<16x16xf32>
    %c3_198 = arith.constant 3 : index
    %c0_199 = arith.constant 0 : index
    %c0_200 = arith.constant 0 : index
    %187 = vector.load %arg5[%c3_198, %c0_199, %c0_200] : memref<4x16x32xf32, #tpu.memory_space<vmem>>, vector<1x16x32xf32>
    %188 = vector.shape_cast %187 : vector<1x16x32xf32> to vector<16x32xf32>
    %cst_201 = arith.constant dense<0.000000e+00> : vector<16x32xf32>
    %189 = tpu.matmul %186, %188, %cst_201 {dimension_numbers = #tpu.dot_dimension_numbers<[1], [0], [0], [1], [0, 0, 1, 1], [], []>} : vector<16x16xf32>, vector<16x32xf32>, vector<16x32xf32> -> vector<16x32xf32>
    %190 = arith.addf %184, %189 : vector<16x32xf32>
    %c0_202 = arith.constant 0 : index
    %c0_203 = arith.constant 0 : index
    %191 = vector.load %arg6[%c0_202, %c0_203] : memref<1x32xf32, #tpu.memory_space<vmem>>, vector<1x32xf32>
    %192 = vector.broadcast %191 : vector<1x32xf32> to vector<16x32xf32>
    %193 = arith.addf %190, %192 : vector<16x32xf32>
    %cst_204 = arith.constant 2.000000e-01 : f32
    %194 = vector.broadcast %cst_204 : f32 to vector<16x32xf32>
    %195 = arith.mulf %194, %193 : vector<16x32xf32>
    %196 = arith.maximumf %193, %195 : vector<16x32xf32>
    %197 = vector.shape_cast %196 : vector<16x32xf32> to vector<2x8x32xf32>
    %c0_205 = arith.constant 0 : index
    %c0_206 = arith.constant 0 : index
    %c0_207 = arith.constant 0 : index
    %198 = vector.load %arg7[%c0_205, %c0_206, %c0_207] : memref<1x8x32xf32, #tpu.memory_space<vmem>>, vector<1x8x32xf32>
    %199 = vector.broadcast %198 : vector<1x8x32xf32> to vector<2x8x32xf32>
    %200 = arith.mulf %197, %199 : vector<2x8x32xf32>
    %cst_208 = arith.constant dense<0.000000e+00> : vector<2x8xf32>
    %201 = vector.multi_reduction <add>, %200, %cst_208 [2] : vector<2x8x32xf32> to vector<2x8xf32>
    %202 = vector.shape_cast %201 : vector<2x8xf32> to vector<2x8x1xf32>
    %cst_209 = arith.constant dense<0.000000e+00> : vector<2x1xf32>
    %203 = vector.multi_reduction <add>, %202, %cst_209 [1] : vector<2x8x1xf32> to vector<2x1xf32>
    %c0_210 = arith.constant 0 : index
    %c0_211 = arith.constant 0 : index
    %204 = vector.load %arg8[%c0_210, %c0_211] : memref<1x1xf32, #tpu.memory_space<vmem>>, vector<1x1xf32>
    %205 = vector.broadcast %204 : vector<1x1xf32> to vector<2x1xf32>
    %206 = arith.addf %203, %205 : vector<2x1xf32>
    %cst_212 = arith.constant 0.000000e+00 : f32
    %207 = vector.broadcast %cst_212 : f32 to vector<8x128xf32>
    %c0_213 = arith.constant 0 : index
    %c0_214 = arith.constant 0 : index
    %208 = vector.load %arg9[%c0_213, %c0_214] : memref<8x128xf32, #tpu.memory_space<vmem>>, vector<8x128xf32>
    tpu.vector_store %arg9[%c0_213, %c0_214], %207 {strides = array<i32>} : memref<8x128xf32, #tpu.memory_space<vmem>>, vector<8x128xf32>,
    %c0_215 = arith.constant 0 : index
    %c0_216 = arith.constant 0 : index
    %209 = vector.load %arg9[%c0_215, %c0_216] : memref<8x128xf32, #tpu.memory_space<vmem>>, vector<2x1xf32>
    tpu.vector_store %arg9[%c0_215, %c0_216], %206 {strides = array<i32>} : memref<8x128xf32, #tpu.memory_space<vmem>>, vector<2x1xf32>,
    return
  }
}

</mosaic_0001>

<llo_original>
// kernel: discriminator_forward.1
$region0: #{discriminator_forward.1}
  #allocation0 [shape = 'u32[]', space=smem, size = 0x4, offset = 0x4, fixed_abs, tag = 'smem constant byte address 0x4 - core index']
  #allocation1 [shape = 'u32[72,128]{1,0:T(1,128)}', space=vmem, size = 0x9000, scoped, tag = 'internal scratch']
  #allocation2 [shape = 'f32[2,38,8]{2,1,0:T(8,128)}', space=vmem, size = 0xa000, scoped, tag = 'scratch operand']
  #allocation3 [shape = 'f32[2,18,16]{2,1,0:T(8,128)}', space=vmem, size = 0x6000, scoped, tag = 'scratch operand']
  #allocation4 [shape = 'f32[1,1]{1,0:T(1,128)S(1)}', space=vmem, size = 0x200, scoped, tag = 'scoped memory for discriminator_forward.1']
  %s0 = inlined_call_operand.vmem [shape: f32[2,78,2], index: 0, kind: input, shape index: {}]
  %s1 = inlined_call_operand.vmem [shape: f32[16,2,8], index: 1, kind: input, shape index: {}]
  %s2 = inlined_call_operand.vmem [shape: f32[1,8], index: 2, kind: input, shape index: {}]
  %s3 = inlined_call_operand.vmem [shape: f32[8,8,16], index: 3, kind: input, shape index: {}]
  %s4 = inlined_call_operand.vmem [shape: f32[1,16], index: 4, kind: input, shape index: {}]
  %s5 = inlined_call_operand.vmem [shape: f32[4,16,32], index: 5, kind: input, shape index: {}]
  %s6 = inlined_call_operand.vmem [shape: f32[1,32], index: 6, kind: input, shape index: {}]
  %s7 = inlined_call_operand.vmem [shape: f32[1,8,32], index: 7, kind: input, shape index: {}]
  %s8 = inlined_call_operand.<no memory space> [shape: f32[1,1], index: 8, kind: input, shape index: {}]
  %s9 = inlined_call_operand.vmem [shape: f32[8,128], index: 9, kind: output, shape index: {}]
  %s10 = sld [smem:[#allocation0]]
  $region46: #{discriminator_forward.1} parent=0
    _
  %s12 = ssub.s32 1, %s10
  %s13 = scalar_select 0, %s12, %s10
  %v14 = vstv %s8
  %15 = vst [vmem:[#allocation4] sm:$0x1] %v14
  // Predicated region
  $region2: #{discriminator_forward.1} parent=0 // pred_check
    _
  $region3: #{discriminator_forward.1} parent=0 // pred_check_branch
    %17 = sbr.rel (0) target = $region5
  $region4: #{discriminator_forward.1} parent=0 // pred_region
    _
  $region5: #{discriminator_forward.1} parent=0 // pred_fallthru
    _
  // Predicated region
  $region6: #{discriminator_forward.1} parent=0 // pred_check
    _
  $region7: #{discriminator_forward.1} parent=0 // pred_check_branch
    %19 = sbr.rel (0) target = $region9
  $region8: #{discriminator_forward.1} parent=0 // pred_region
    _
  $region9: #{discriminator_forward.1} parent=0 // pred_fallthru
    _
  // Predicated region
  $region10: #{discriminator_forward.1} parent=0 // pred_check
    _
  $region11: #{discriminator_forward.1} parent=0 // pred_check_branch
    %21 = sbr.rel (0) target = $region13
  $region12: #{discriminator_forward.1} parent=0 // pred_region
    _
  $region13: #{discriminator_forward.1} parent=0 // pred_fallthru
    _
  // Predicated region
  $region14: #{discriminator_forward.1} parent=0 // pred_check
    _
  $region15: #{discriminator_forward.1} parent=0 // pred_check_branch
    %23 = sbr.rel (0) target = $region17
  $region16: #{discriminator_forward.1} parent=0 // pred_region
    _
  $region17: #{discriminator_forward.1} parent=0 // pred_fallthru
    _
  // Predicated region
  $region18: #{discriminator_forward.1} parent=0 // pred_check
    _
  $region19: #{discriminator_forward.1} parent=0 // pred_check_branch
    %25 = sbr.rel (0) target = $region21
  $region20: #{discriminator_forward.1} parent=0 // pred_region
    _
  $region21: #{discriminator_forward.1} parent=0 // pred_fallthru
    _
  // Predicated region
  $region22: #{discriminator_forward.1} parent=0 // pred_check
    _
  $region23: #{discriminator_forward.1} parent=0 // pred_check_branch
    %27 = sbr.rel (0) target = $region25
  $region24: #{discriminator_forward.1} parent=0 // pred_region
    _
  $region25: #{discriminator_forward.1} parent=0 // pred_fallthru
    _
  // Predicated region
  $region26: #{discriminator_forward.1} parent=0 // pred_check
    _
  $region27: #{discriminator_forward.1} parent=0 // pred_check_branch
    %29 = sbr.rel (0) target = $region29
  $region28: #{discriminator_forward.1} parent=0 // pred_region
    _
  $region29: #{discriminator_forward.1} parent=0 // pred_fallthru
    _
  // Predicated region
  $region30: #{discriminator_forward.1} parent=0 // pred_check
    _
  $region31: #{discriminator_forward.1} parent=0 // pred_check_branch
    %31 = sbr.rel (0) target = $region33
  $region32: #{discriminator_forward.1} parent=0 // pred_region
    _
  $region33: #{discriminator_forward.1} parent=0 // pred_fallthru
    _
  // Predicated region
  $region34: #{discriminator_forward.1} parent=0 // pred_check
    _
  $region35: #{discriminator_forward.1} parent=0 // pred_check_branch
    %33 = sbr.rel (0) target = $region37
  $region36: #{discriminator_forward.1} parent=0 // pred_region
    _
  $region37: #{discriminator_forward.1} parent=0 // pred_fallthru
    _
  %v34 = vld [vmem:[%s0] ss:$2 sm:$0xff]
  %s35 = scalar_lea.vmem %s0, 16
  %v36 = vld [vmem:[%s35] ss:$2 sm:$0xff]
  %s37 = scalar_lea.vmem %s0, 32
  %v38 = vld [vmem:[%s37] ss:$2 sm:$0xff]
  %s39 = scalar_lea.vmem %s0, 48
  %v40 = vld [vmem:[%s39] ss:$2 sm:$0xff]
  %s41 = scalar_lea.vmem %s0, 80
  %v42 = vld [vmem:[%s41] ss:$2 sm:$0xff]
  %s43 = scalar_lea.vmem %s0, 96
  %v44 = vld [vmem:[%s43] ss:$2 sm:$0xff]
  %s45 = scalar_lea.vmem %s0, 112
  %v46 = vld [vmem:[%s45] ss:$2 sm:$0xff]
  %s47 = scalar_lea.vmem %s0, 128
  %v48 = vld [vmem:[%s47] ss:$2 sm:$0xff]
  %v49 = vld [vmem:[%s1] sm:$0x3]
  %s50 = scalar_lea.vmem %s0, 1
  %v51 = vld [vmem:[%s50] ss:$2 sm:$0xff]
  %s52 = scalar_lea.vmem %s0, 17
  %v53 = vld [vmem:[%s52] ss:$2 sm:$0xff]
  %s54 = scalar_lea.vmem %s0, 33
  %v55 = vld [vmem:[%s54] ss:$2 sm:$0xff]
  %s56 = scalar_lea.vmem %s0, 49
  %v57 = vld [vmem:[%s56] ss:$2 sm:$0xff]
  %s58 = scalar_lea.vmem %s0, 81
  %v59 = vld [vmem:[%s58] ss:$2 sm:$0xff]
  %s60 = scalar_lea.vmem %s0, 97
  %v61 = vld [vmem:[%s60] ss:$2 sm:$0xff]
  %s62 = scalar_lea.vmem %s0, 113
  %v63 = vld [vmem:[%s62] ss:$2 sm:$0xff]
  %s64 = scalar_lea.vmem %s0, 129
  %v65 = vld [vmem:[%s64] ss:$2 sm:$0xff]
  %s66 = scalar_lea.vmem %s1, 2
  %v67 = vld [vmem:[%s66] sm:$0x3]
  %vm68 = vcmask 15360
  %v70 = vsel %vm68, %v51, 0
  %v73 = vsel %vm68, %v53, 0
  %v76 = vsel %vm68, %v55, 0
  %v79 = vsel %vm68, %v57, 0
  %v82 = vsel %vm68, %v59, 0
  %v85 = vsel %vm68, %v61, 0
  %v88 = vsel %vm68, %v63, 0
  %v91 = vsel %vm68, %v65, 0
  %vm93 = vcmask 1041408
  %v95 = vsel %vm93, %v67, 0
  %97 = vmatpush.msra.mxu0 0.0
  %98 = vmatpush.msra.mxu0 0.0
  %99 = vmatpush.msra.mxu0 0.0
  %100 = vmatpush.msra.mxu0 0.0
  %101 = vmatpush.msra.mxu0 0.0
  %102 = vmatpush.msra.mxu0 0.0
  %103 = vmatpush.msra.mxu0 0.0
  %104 = vmatpush.msra.mxu0 0.0
  %105 = vmatpush.msra.mxu0 0.0
  %106 = vmatpush.msra.mxu0 0.0
  %107 = vmatpush.msra.mxu0 0.0
  %108 = vmatpush.msra.mxu0 0.0
  %109 = vmatpush.msra.mxu0 0.0
  %110 = vmatpush.msra.mxu0 0.0
  %111 = vmatpush.msra.mxu0 0.0
  %112 = vmatpush.msra.mxu0 %v95
  %113 = vmatmul.f32.gmra.mxu0 %v70
  %v114 = vpop.f32.mrf.mxu0
  %v115 = vadd.f32 0.0, %v114
  %116 = vmatmul.f32.gmra.mxu0 %v73
  %v117 = vpop.f32.mrf.mxu0
  %v118 = vadd.f32 0.0, %v117
  %119 = vmatmul.f32.gmra.mxu0 %v76
  %v120 = vpop.f32.mrf.mxu0
  %v121 = vadd.f32 0.0, %v120
  %122 = vmatmul.f32.gmra.mxu0 %v79
  %v123 = vpop.f32.mrf.mxu0
  %v124 = vadd.f32 0.0, %v123
  %125 = vmatmul.f32.gmra.mxu0 %v82
  %v126 = vpop.f32.mrf.mxu0
  %v127 = vadd.f32 0.0, %v126
  %128 = vmatmul.f32.gmra.mxu0 %v85
  %v129 = vpop.f32.mrf.mxu0
  %v130 = vadd.f32 0.0, %v129
  %131 = vmatmul.f32.gmra.mxu0 %v88
  %v132 = vpop.f32.mrf.mxu0
  %v133 = vadd.f32 0.0, %v132
  %134 = vmatmul.f32.gmra.mxu0 %v91
  %v135 = vpop.f32.mrf.mxu0
  %v136 = vadd.f32 0.0, %v135
  %137 = vdwg.mxu0
  %v139 = vsel %vm68, %v34, 0
  %v142 = vsel %vm68, %v36, 0
  %v145 = vsel %vm68, %v38, 0
  %v148 = vsel %vm68, %v40, 0
  %v151 = vsel %vm68, %v42, 0
  %v154 = vsel %vm68, %v44, 0
  %v157 = vsel %vm68, %v46, 0
  %v160 = vsel %vm68, %v48, 0
  %v163 = vsel %vm93, %v49, 0
  %165 = vmatpush.msra.mxu0 0.0
  %166 = vmatpush.msra.mxu0 0.0
  %167 = vmatpush.msra.mxu0 0.0
  %168 = vmatpush.msra.mxu0 0.0
  %169 = vmatpush.msra.mxu0 0.0
  %170 = vmatpush.msra.mxu0 0.0
  %171 = vmatpush.msra.mxu0 0.0
  %172 = vmatpush.msra.mxu0 0.0
  %173 = vmatpush.msra.mxu0 0.0
  %174 = vmatpush.msra.mxu0 0.0
  %175 = vmatpush.msra.mxu0 0.0
  %176 = vmatpush.msra.mxu0 0.0
  %177 = vmatpush.msra.mxu0 0.0
  %178 = vmatpush.msra.mxu0 0.0
  %179 = vmatpush.msra.mxu0 0.0
  %180 = vmatpush.msra.mxu0 %v163
  %181 = vmatmul.f32.gmra.mxu0 %v139
  %v182 = vpop.f32.mrf.mxu0
  %v183 = vadd.f32 %v115, %v182
  %184 = vmatmul.f32.gmra.mxu0 %v142
  %v185 = vpop.f32.mrf.mxu0
  %v186 = vadd.f32 %v118, %v185
  %187 = vmatmul.f32.gmra.mxu0 %v145
  %v188 = vpop.f32.mrf.mxu0
  %v189 = vadd.f32 %v121, %v188
  %190 = vmatmul.f32.gmra.mxu0 %v148
  %v191 = vpop.f32.mrf.mxu0
  %v192 = vadd.f32 %v124, %v191
  %193 = vmatmul.f32.gmra.mxu0 %v151
  %v194 = vpop.f32.mrf.mxu0
  %v195 = vadd.f32 %v127, %v194
  %196 = vmatmul.f32.gmra.mxu0 %v154
  %v197 = vpop.f32.mrf.mxu0
  %v198 = vadd.f32 %v130, %v197
  %199 = vmatmul.f32.gmra.mxu0 %v157
  %v200 = vpop.f32.mrf.mxu0
  %v201 = vadd.f32 %v133, %v200
  %202 = vmatmul.f32.gmra.mxu0 %v160
  %v203 = vpop.f32.mrf.mxu0
  %v204 = vadd.f32 %v136, %v203
  %205 = vdwg.mxu0
  %s206 = scalar_lea.vmem %s0, 2
  %v207 = vld [vmem:[%s206] ss:$2 sm:$0xff]
  %s208 = scalar_lea.vmem %s0, 18
  %v209 = vld [vmem:[%s208] ss:$2 sm:$0xff]
  %s210 = scalar_lea.vmem %s0, 34
  %v211 = vld [vmem:[%s210] ss:$2 sm:$0xff]
  %s212 = scalar_lea.vmem %s0, 50
  %v213 = vld [vmem:[%s212] ss:$2 sm:$0xff]
  %s214 = scalar_lea.vmem %s0, 82
  %v215 = vld [vmem:[%s214] ss:$2 sm:$0xff]
  %s216 = scalar_lea.vmem %s0, 98
  %v217 = vld [vmem:[%s216] ss:$2 sm:$0xff]
  %s218 = scalar_lea.vmem %s0, 114
  %v219 = vld [vmem:[%s218] ss:$2 sm:$0xff]
  %s220 = scalar_lea.vmem %s0, 130
  %v221 = vld [vmem:[%s220] ss:$2 sm:$0xff]
  %s222 = scalar_lea.vmem %s1, 4
  %v223 = vld [vmem:[%s222] sm:$0x3]
  %v225 = vsel %vm68, %v207, 0
  %v228 = vsel %vm68, %v209, 0
  %v231 = vsel %vm68, %v211, 0
  %v234 = vsel %vm68, %v213, 0
  %v237 = vsel %vm68, %v215, 0
  %v240 = vsel %vm68, %v217, 0
  %v243 = vsel %vm68, %v219, 0
  %v246 = vsel %vm68, %v221, 0
  %v249 = vsel %vm93, %v223, 0
  %251 = vmatpush.msra.mxu0 0.0
  %252 = vmatpush.msra.mxu0 0.0
  %253 = vmatpush.msra.mxu0 0.0
  %254 = vmatpush.msra.mxu0 0.0
  %255 = vmatpush.msra.mxu0 0.0
  %256 = vmatpush.msra.mxu0 0.0
  %257 = vmatpush.msra.mxu0 0.0
  %258 = vmatpush.msra.mxu0 0.0
  %259 = vmatpush.msra.mxu0 0.0
  %260 = vmatpush.msra.mxu0 0.0
  %261 = vmatpush.msra.mxu0 0.0
  %262 = vmatpush.msra.mxu0 0.0
  %263 = vmatpush.msra.mxu0 0.0
  %264 = vmatpush.msra.mxu0 0.0
  %265 = vmatpush.msra.mxu0 0.0
  %266 = vmatpush.msra.mxu0 %v249
  %267 = vmatmul.f32.gmra.mxu0 %v225
  %v268 = vpop.f32.mrf.mxu0
  %v269 = vadd.f32 0.0, %v268
  %270 = vmatmul.f32.gmra.mxu0 %v228
  %v271 = vpop.f32.mrf.mxu0
  %v272 = vadd.f32 0.0, %v271
  %273 = vmatmul.f32.gmra.mxu0 %v231
  %v274 = vpop.f32.mrf.mxu0
  %v275 = vadd.f32 0.0, %v274
  %276 = vmatmul.f32.gmra.mxu0 %v234
  %v277 = vpop.f32.mrf.mxu0
  %v278 = vadd.f32 0.0, %v277
  %279 = vmatmul.f32.gmra.mxu0 %v237
  %v280 = vpop.f32.mrf.mxu0
  %v281 = vadd.f32 0.0, %v280
  %282 = vmatmul.f32.gmra.mxu0 %v240
  %v283 = vpop.f32.mrf.mxu0
  %v284 = vadd.f32 0.0, %v283
  %285 = vmatmul.f32.gmra.mxu0 %v243
  %v286 = vpop.f32.mrf.mxu0
  %v287 = vadd.f32 0.0, %v286
  %288 = vmatmul.f32.gmra.mxu0 %v246
  %v289 = vpop.f32.mrf.mxu0
  %v290 = vadd.f32 0.0, %v289
  %291 = vdwg.mxu0
  %v292 = vadd.f32 %v183, %v269
  %v293 = vadd.f32 %v186, %v272
  %v294 = vadd.f32 %v189, %v275
  %v295 = vadd.f32 %v192, %v278
  %v296 = vadd.f32 %v195, %v281
  %v297 = vadd.f32 %v198, %v284
  %v298 = vadd.f32 %v201, %v287
  %v299 = vadd.f32 %v204, %v290
  %s300 = scalar_lea.vmem %s0, 3
  %v301 = vld [vmem:[%s300] ss:$2 sm:$0xff]
  %s302 = scalar_lea.vmem %s0, 19
  %v303 = vld [vmem:[%s302] ss:$2 sm:$0xff]
  %s304 = scalar_lea.vmem %s0, 35
  %v305 = vld [vmem:[%s304] ss:$2 sm:$0xff]
  %s306 = scalar_lea.vmem %s0, 51
  %v307 = vld [vmem:[%s306] ss:$2 sm:$0xff]
  %s308 = scalar_lea.vmem %s0, 83
  %v309 = vld [vmem:[%s308] ss:$2 sm:$0xff]
  %s310 = scalar_lea.vmem %s0, 99
  %v311 = vld [vmem:[%s310] ss:$2 sm:$0xff]
  %s312 = scalar_lea.vmem %s0, 115
  %v313 = vld [vmem:[%s312] ss:$2 sm:$0xff]
  %s314 = scalar_lea.vmem %s0, 131
  %v315 = vld [vmem:[%s314] ss:$2 sm:$0xff]
  %s316 = scalar_lea.vmem %s1, 6
  %v317 = vld [vmem:[%s316] sm:$0x3]
  %v319 = vsel %vm68, %v301, 0
  %v322 = vsel %vm68, %v303, 0
  %v325 = vsel %vm68, %v305, 0
  %v328 = vsel %vm68, %v307, 0
  %v331 = vsel %vm68, %v309, 0
  %v334 = vsel %vm68, %v311, 0
  %v337 = vsel %vm68, %v313, 0
  %v340 = vsel %vm68, %v315, 0
  %v343 = vsel %vm93, %v317, 0
  %345 = vmatpush.msra.mxu0 0.0
  %346 = vmatpush.msra.mxu0 0.0
  %347 = vmatpush.msra.mxu0 0.0
  %348 = vmatpush.msra.mxu0 0.0
  %349 = vmatpush.msra.mxu0 0.0
  %350 = vmatpush.msra.mxu0 0.0
  %351 = vmatpush.msra.mxu0 0.0
  %352 = vmatpush.msra.mxu0 0.0
  %353 = vmatpush.msra.mxu0 0.0
  %354 = vmatpush.msra.mxu0 0.0
  %355 = vmatpush.msra.mxu0 0.0
  %356 = vmatpush.msra.mxu0 0.0
  %357 = vmatpush.msra.mxu0 0.0
  %358 = vmatpush.msra.mxu0 0.0
  %359 = vmatpush.msra.mxu0 0.0
  %360 = vmatpush.msra.mxu0 %v343
  %361 = vmatmul.f32.gmra.mxu0 %v319
  %v362 = vpop.f32.mrf.mxu0
  %v363 = vadd.f32 0.0, %v362
  %364 = vmatmul.f32.gmra.mxu0 %v322
  %v365 = vpop.f32.mrf.mxu0
  %v366 = vadd.f32 0.0, %v365
  %367 = vmatmul.f32.gmra.mxu0 %v325
  %v368 = vpop.f32.mrf.mxu0
  %v369 = vadd.f32 0.0, %v368
  %370 = vmatmul.f32.gmra.mxu0 %v328
  %v371 = vpop.f32.mrf.mxu0
  %v372 = vadd.f32 0.0, %v371
  %373 = vmatmul.f32.gmra.mxu0 %v331
  %v374 = vpop.f32.mrf.mxu0
  %v375 = vadd.f32 0.0, %v374
  %376 = vmatmul.f32.gmra.mxu0 %v334
  %v377 = vpop.f32.mrf.mxu0
  %v378 = vadd.f32 0.0, %v377
  %379 = vmatmul.f32.gmra.mxu0 %v337
  %v380 = vpop.f32.mrf.mxu0
  %v381 = vadd.f32 0.0, %v380
  %382 = vmatmul.f32.gmra.mxu0 %v340
  %v383 = vpop.f32.mrf.mxu0
  %v384 = vadd.f32 0.0, %v383
  %385 = vdwg.mxu0
  %v386 = vadd.f32 %v292, %v363
  %v387 = vadd.f32 %v293, %v366
  %v388 = vadd.f32 %v294, %v369
  %v389 = vadd.f32 %v295, %v372
  %v390 = vadd.f32 %v296, %v375
  %v391 = vadd.f32 %v297, %v378
  %v392 = vadd.f32 %v298, %v381
  %v393 = vadd.f32 %v299, %v384
  %s394 = scalar_lea.vmem %s0, 4
  %v395 = vld [vmem:[%s394] ss:$2 sm:$0xff]
  %s396 = scalar_lea.vmem %s0, 20
  %v397 = vld [vmem:[%s396] ss:$2 sm:$0xff]
  %s398 = scalar_lea.vmem %s0, 36
  %v399 = vld [vmem:[%s398] ss:$2 sm:$0xff]
  %s400 = scalar_lea.vmem %s0, 52
  %v401 = vld [vmem:[%s400] ss:$2 sm:$0xff]
  %s402 = scalar_lea.vmem %s0, 84
  %v403 = vld [vmem:[%s402] ss:$2 sm:$0xff]
  %s404 = scalar_lea.vmem %s0, 100
  %v405 = vld [vmem:[%s404] ss:$2 sm:$0xff]
  %s406 = scalar_lea.vmem %s0, 116
  %v407 = vld [vmem:[%s406] ss:$2 sm:$0xff]
  %s408 = scalar_lea.vmem %s0, 132
  %v409 = vld [vmem:[%s408] ss:$2 sm:$0xff]
  %s410 = scalar_lea.vmem %s1, 8
  %v411 = vld [vmem:[%s410] sm:$0x3]
  %v413 = vsel %vm68, %v395, 0
  %v416 = vsel %vm68, %v397, 0
  %v419 = vsel %vm68, %v399, 0
  %v422 = vsel %vm68, %v401, 0
  %v425 = vsel %vm68, %v403, 0
  %v428 = vsel %vm68, %v405, 0
  %v431 = vsel %vm68, %v407, 0
  %v434 = vsel %vm68, %v409, 0
  %v437 = vsel %vm93, %v411, 0
  %439 = vmatpush.msra.mxu0 0.0
  %440 = vmatpush.msra.mxu0 0.0
  %441 = vmatpush.msra.mxu0 0.0
  %442 = vmatpush.msra.mxu0 0.0
  %443 = vmatpush.msra.mxu0 0.0
  %444 = vmatpush.msra.mxu0 0.0
  %445 = vmatpush.msra.mxu0 0.0
  %446 = vmatpush.msra.mxu0 0.0
  %447 = vmatpush.msra.mxu0 0.0
  %448 = vmatpush.msra.mxu0 0.0
  %449 = vmatpush.msra.mxu0 0.0
  %450 = vmatpush.msra.mxu0 0.0
  %451 = vmatpush.msra.mxu0 0.0
  %452 = vmatpush.msra.mxu0 0.0
  %453 = vmatpush.msra.mxu0 0.0
  %454 = vmatpush.msra.mxu0 %v437
  %455 = vmatmul.f32.gmra.mxu0 %v413
  %v456 = vpop.f32.mrf.mxu0
  %v457 = vadd.f32 0.0, %v456
  %458 = vmatmul.f32.gmra.mxu0 %v416
  %v459 = vpop.f32.mrf.mxu0
  %v460 = vadd.f32 0.0, %v459
  %461 = vmatmul.f32.gmra.mxu0 %v419
  %v462 = vpop.f32.mrf.mxu0
  %v463 = vadd.f32 0.0, %v462
  %464 = vmatmul.f32.gmra.mxu0 %v422
  %v465 = vpop.f32.mrf.mxu0
  %v466 = vadd.f32 0.0, %v465
  %467 = vmatmul.f32.gmra.mxu0 %v425
  %v468 = vpop.f32.mrf.mxu0
  %v469 = vadd.f32 0.0, %v468
  %470 = vmatmul.f32.gmra.mxu0 %v428
  %v471 = vpop.f32.mrf.mxu0
  %v472 = vadd.f32 0.0, %v471
  %473 = vmatmul.f32.gmra.mxu0 %v431
  %v474 = vpop.f32.mrf.mxu0
  %v475 = vadd.f32 0.0, %v474
  %476 = vmatmul.f32.gmra.mxu0 %v434
  %v477 = vpop.f32.mrf.mxu0
  %v478 = vadd.f32 0.0, %v477
  %479 = vdwg.mxu0
  %v480 = vadd.f32 %v386, %v457
  %v481 = vadd.f32 %v387, %v460
  %v482 = vadd.f32 %v388, %v463
  %v483 = vadd.f32 %v389, %v466
  %v484 = vadd.f32 %v390, %v469
  %v485 = vadd.f32 %v391, %v472
  %v486 = vadd.f32 %v392, %v475
  %v487 = vadd.f32 %v393, %v478
  %s488 = scalar_lea.vmem %s0, 5
  %v489 = vld [vmem:[%s488] ss:$2 sm:$0xff]
  %s490 = scalar_lea.vmem %s0, 21
  %v491 = vld [vmem:[%s490] ss:$2 sm:$0xff]
  %s492 = scalar_lea.vmem %s0, 37
  %v493 = vld [vmem:[%s492] ss:$2 sm:$0xff]
  %s494 = scalar_lea.vmem %s0, 53
  %v495 = vld [vmem:[%s494] ss:$2 sm:$0xff]
  %s496 = scalar_lea.vmem %s0, 85
  %v497 = vld [vmem:[%s496] ss:$2 sm:$0xff]
  %s498 = scalar_lea.vmem %s0, 101
  %v499 = vld [vmem:[%s498] ss:$2 sm:$0xff]
  %s500 = scalar_lea.vmem %s0, 117
  %v501 = vld [vmem:[%s500] ss:$2 sm:$0xff]
  %s502 = scalar_lea.vmem %s0, 133
  %v503 = vld [vmem:[%s502] ss:$2 sm:$0xff]
  %s504 = scalar_lea.vmem %s1, 10
  %v505 = vld [vmem:[%s504] sm:$0x3]
  %v507 = vsel %vm68, %v489, 0
  %v510 = vsel %vm68, %v491, 0
  %v513 = vsel %vm68, %v493, 0
  %v516 = vsel %vm68, %v495, 0
  %v519 = vsel %vm68, %v497, 0
  %v522 = vsel %vm68, %v499, 0
  %v525 = vsel %vm68, %v501, 0
  %v528 = vsel %vm68, %v503, 0
  %v531 = vsel %vm93, %v505, 0
  %533 = vmatpush.msra.mxu0 0.0
  %534 = vmatpush.msra.mxu0 0.0
  %535 = vmatpush.msra.mxu0 0.0
  %536 = vmatpush.msra.mxu0 0.0
  %537 = vmatpush.msra.mxu0 0.0
  %538 = vmatpush.msra.mxu0 0.0
  %539 = vmatpush.msra.mxu0 0.0
  %540 = vmatpush.msra.mxu0 0.0
  %541 = vmatpush.msra.mxu0 0.0
  %542 = vmatpush.msra.mxu0 0.0
  %543 = vmatpush.msra.mxu0 0.0
  %544 = vmatpush.msra.mxu0 0.0
  %545 = vmatpush.msra.mxu0 0.0
  %546 = vmatpush.msra.mxu0 0.0
  %547 = vmatpush.msra.mxu0 0.0
  %548 = vmatpush.msra.mxu0 %v531
  %549 = vmatmul.f32.gmra.mxu0 %v507
  %v550 = vpop.f32.mrf.mxu0
  %v551 = vadd.f32 0.0, %v550
  %552 = vmatmul.f32.gmra.mxu0 %v510
  %v553 = vpop.f32.mrf.mxu0
  %v554 = vadd.f32 0.0, %v553
  %555 = vmatmul.f32.gmra.mxu0 %v513
  %v556 = vpop.f32.mrf.mxu0
  %v557 = vadd.f32 0.0, %v556
  %558 = vmatmul.f32.gmra.mxu0 %v516
  %v559 = vpop.f32.mrf.mxu0
  %v560 = vadd.f32 0.0, %v559
  %561 = vmatmul.f32.gmra.mxu0 %v519
  %v562 = vpop.f32.mrf.mxu0
  %v563 = vadd.f32 0.0, %v562
  %564 = vmatmul.f32.gmra.mxu0 %v522
  %v565 = vpop.f32.mrf.mxu0
  %v566 = vadd.f32 0.0, %v565
  %567 = vmatmul.f32.gmra.mxu0 %v525
  %v568 = vpop.f32.mrf.mxu0
  %v569 = vadd.f32 0.0, %v568
  %570 = vmatmul.f32.gmra.mxu0 %v528
  %v571 = vpop.f32.mrf.mxu0
  %v572 = vadd.f32 0.0, %v571
  %573 = vdwg.mxu0
  %v574 = vadd.f32 %v480, %v551
  %v575 = vadd.f32 %v481, %v554
  %v576 = vadd.f32 %v482, %v557
  %v577 = vadd.f32 %v483, %v560
  %v578 = vadd.f32 %v484, %v563
  %v579 = vadd.f32 %v485, %v566
  %v580 = vadd.f32 %v486, %v569
  %v581 = vadd.f32 %v487, %v572
  %s582 = scalar_lea.vmem %s0, 6
  %v583 = vld [vmem:[%s582] ss:$2 sm:$0xff]
  %s584 = scalar_lea.vmem %s0, 22
  %v585 = vld [vmem:[%s584] ss:$2 sm:$0xff]
  %s586 = scalar_lea.vmem %s0, 38
  %v587 = vld [vmem:[%s586] ss:$2 sm:$0xff]
  %s588 = scalar_lea.vmem %s0, 54
  %v589 = vld [vmem:[%s588] ss:$2 sm:$0xff]
  %s590 = scalar_lea.vmem %s0, 86
  %v591 = vld [vmem:[%s590] ss:$2 sm:$0xff]
  %s592 = scalar_lea.vmem %s0, 102
  %v593 = vld [vmem:[%s592] ss:$2 sm:$0xff]
  %s594 = scalar_lea.vmem %s0, 118
  %v595 = vld [vmem:[%s594] ss:$2 sm:$0xff]
  %s596 = scalar_lea.vmem %s0, 134
  %v597 = vld [vmem:[%s596] ss:$2 sm:$0xff]
  %s598 = scalar_lea.vmem %s1, 12
  %v599 = vld [vmem:[%s598] sm:$0x3]
  %v601 = vsel %vm68, %v583, 0
  %v604 = vsel %vm68, %v585, 0
  %v607 = vsel %vm68, %v587, 0
  %v610 = vsel %vm68, %v589, 0
  %v613 = vsel %vm68, %v591, 0
  %v616 = vsel %vm68, %v593, 0
  %v619 = vsel %vm68, %v595, 0
  %v622 = vsel %vm68, %v597, 0
  %v625 = vsel %vm93, %v599, 0
  %627 = vmatpush.msra.mxu0 0.0
  %628 = vmatpush.msra.mxu0 0.0
  %629 = vmatpush.msra.mxu0 0.0
  %630 = vmatpush.msra.mxu0 0.0
  %631 = vmatpush.msra.mxu0 0.0
  %632 = vmatpush.msra.mxu0 0.0
  %633 = vmatpush.msra.mxu0 0.0
  %634 = vmatpush.msra.mxu0 0.0
  %635 = vmatpush.msra.mxu0 0.0
  %636 = vmatpush.msra.mxu0 0.0
  %637 = vmatpush.msra.mxu0 0.0
  %638 = vmatpush.msra.mxu0 0.0
  %639 = vmatpush.msra.mxu0 0.0
  %640 = vmatpush.msra.mxu0 0.0
  %641 = vmatpush.msra.mxu0 0.0
  %642 = vmatpush.msra.mxu0 %v625
  %643 = vmatmul.f32.gmra.mxu0 %v601
  %v644 = vpop.f32.mrf.mxu0
  %v645 = vadd.f32 0.0, %v644
  %646 = vmatmul.f32.gmra.mxu0 %v604
  %v647 = vpop.f32.mrf.mxu0
  %v648 = vadd.f32 0.0, %v647
  %649 = vmatmul.f32.gmra.mxu0 %v607
  %v650 = vpop.f32.mrf.mxu0
  %v651 = vadd.f32 0.0, %v650
  %652 = vmatmul.f32.gmra.mxu0 %v610
  %v653 = vpop.f32.mrf.mxu0
  %v654 = vadd.f32 0.0, %v653
  %655 = vmatmul.f32.gmra.mxu0 %v613
  %v656 = vpop.f32.mrf.mxu0
  %v657 = vadd.f32 0.0, %v656
  %658 = vmatmul.f32.gmra.mxu0 %v616
  %v659 = vpop.f32.mrf.mxu0
  %v660 = vadd.f32 0.0, %v659
  %661 = vmatmul.f32.gmra.mxu0 %v619
  %v662 = vpop.f32.mrf.mxu0
  %v663 = vadd.f32 0.0, %v662
  %664 = vmatmul.f32.gmra.mxu0 %v622
  %v665 = vpop.f32.mrf.mxu0
  %v666 = vadd.f32 0.0, %v665
  %667 = vdwg.mxu0
  %v668 = vadd.f32 %v574, %v645
  %v669 = vadd.f32 %v575, %v648
  %v670 = vadd.f32 %v576, %v651
  %v671 = vadd.f32 %v577, %v654
  %v672 = vadd.f32 %v578, %v657
  %v673 = vadd.f32 %v579, %v660
  %v674 = vadd.f32 %v580, %v663
  %v675 = vadd.f32 %v581, %v666
  %s676 = scalar_lea.vmem %s0, 7
  %v677 = vld [vmem:[%s676] ss:$2 sm:$0xff]
  %s678 = scalar_lea.vmem %s0, 23
  %v679 = vld [vmem:[%s678] ss:$2 sm:$0xff]
  %s680 = scalar_lea.vmem %s0, 39
  %v681 = vld [vmem:[%s680] ss:$2 sm:$0xff]
  %s682 = scalar_lea.vmem %s0, 55
  %v683 = vld [vmem:[%s682] ss:$2 sm:$0xff]
  %s684 = scalar_lea.vmem %s0, 87
  %v685 = vld [vmem:[%s684] ss:$2 sm:$0xff]
  %s686 = scalar_lea.vmem %s0, 103
  %v687 = vld [vmem:[%s686] ss:$2 sm:$0xff]
  %s688 = scalar_lea.vmem %s0, 119
  %v689 = vld [vmem:[%s688] ss:$2 sm:$0xff]
  %s690 = scalar_lea.vmem %s0, 135
  %v691 = vld [vmem:[%s690] ss:$2 sm:$0xff]
  %s692 = scalar_lea.vmem %s1, 14
  %v693 = vld [vmem:[%s692] sm:$0x3]
  %v695 = vsel %vm68, %v677, 0
  %v698 = vsel %vm68, %v679, 0
  %v701 = vsel %vm68, %v681, 0
  %v704 = vsel %vm68, %v683, 0
  %v707 = vsel %vm68, %v685, 0
  %v710 = vsel %vm68, %v687, 0
  %v713 = vsel %vm68, %v689, 0
  %v716 = vsel %vm68, %v691, 0
  %v719 = vsel %vm93, %v693, 0
  %721 = vmatpush.msra.mxu0 0.0
  %722 = vmatpush.msra.mxu0 0.0
  %723 = vmatpush.msra.mxu0 0.0
  %724 = vmatpush.msra.mxu0 0.0
  %725 = vmatpush.msra.mxu0 0.0
  %726 = vmatpush.msra.mxu0 0.0
  %727 = vmatpush.msra.mxu0 0.0
  %728 = vmatpush.msra.mxu0 0.0
  %729 = vmatpush.msra.mxu0 0.0
  %730 = vmatpush.msra.mxu0 0.0
  %731 = vmatpush.msra.mxu0 0.0
  %732 = vmatpush.msra.mxu0 0.0
  %733 = vmatpush.msra.mxu0 0.0
  %734 = vmatpush.msra.mxu0 0.0
  %735 = vmatpush.msra.mxu0 0.0
  %736 = vmatpush.msra.mxu0 %v719
  %737 = vmatmul.f32.gmra.mxu0 %v695
  %v738 = vpop.f32.mrf.mxu0
  %v739 = vadd.f32 0.0, %v738
  %740 = vmatmul.f32.gmra.mxu0 %v698
  %v741 = vpop.f32.mrf.mxu0
  %v742 = vadd.f32 0.0, %v741
  %743 = vmatmul.f32.gmra.mxu0 %v701
  %v744 = vpop.f32.mrf.mxu0
  %v745 = vadd.f32 0.0, %v744
  %746 = vmatmul.f32.gmra.mxu0 %v704
  %v747 = vpop.f32.mrf.mxu0
  %v748 = vadd.f32 0.0, %v747
  %749 = vmatmul.f32.gmra.mxu0 %v707
  %v750 = vpop.f32.mrf.mxu0
  %v751 = vadd.f32 0.0, %v750
  %752 = vmatmul.f32.gmra.mxu0 %v710
  %v753 = vpop.f32.mrf.mxu0
  %v754 = vadd.f32 0.0, %v753
  %755 = vmatmul.f32.gmra.mxu0 %v713
  %v756 = vpop.f32.mrf.mxu0
  %v757 = vadd.f32 0.0, %v756
  %758 = vmatmul.f32.gmra.mxu0 %v716
  %v759 = vpop.f32.mrf.mxu0
  %v760 = vadd.f32 0.0, %v759
  %761 = vdwg.mxu0
  %v762 = vadd.f32 %v668, %v739
  %v763 = vadd.f32 %v669, %v742
  %v764 = vadd.f32 %v670, %v745
  %v765 = vadd.f32 %v671, %v748
  %v766 = vadd.f32 %v672, %v751
  %v767 = vadd.f32 %v673, %v754
  %v768 = vadd.f32 %v674, %v757
  %v769 = vadd.f32 %v675, %v760
  %s770 = scalar_lea.vmem %s0, 8
  %v771 = vld [vmem:[%s770] ss:$2 sm:$0xff]
  %s772 = scalar_lea.vmem %s0, 24
  %v773 = vld [vmem:[%s772] ss:$2 sm:$0xff]
  %s774 = scalar_lea.vmem %s0, 40
  %v775 = vld [vmem:[%s774] ss:$2 sm:$0xff]
  %s776 = scalar_lea.vmem %s0, 56
  %v777 = vld [vmem:[%s776] ss:$2 sm:$0xff]
  %s778 = scalar_lea.vmem %s0, 88
  %v779 = vld [vmem:[%s778] ss:$2 sm:$0xff]
  %s780 = scalar_lea.vmem %s0, 104
  %v781 = vld [vmem:[%s780] ss:$2 sm:$0xff]
  %s782 = scalar_lea.vmem %s0, 120
  %v783 = vld [vmem:[%s782] ss:$2 sm:$0xff]
  %s784 = scalar_lea.vmem %s0, 136
  %v785 = vld [vmem:[%s784] ss:$2 sm:$0xff]
  %s786 = scalar_lea.vmem %s1, 16
  %v787 = vld [vmem:[%s786] sm:$0x3]
  %v789 = vsel %vm68, %v771, 0
  %v792 = vsel %vm68, %v773, 0
  %v795 = vsel %vm68, %v775, 0
  %v798 = vsel %vm68, %v777, 0
  %v801 = vsel %vm68, %v779, 0
  %v804 = vsel %vm68, %v781, 0
  %v807 = vsel %vm68, %v783, 0
  %v810 = vsel %vm68, %v785, 0
  %v813 = vsel %vm93, %v787, 0
  %815 = vmatpush.msra.mxu0 0.0
  %816 = vmatpush.msra.mxu0 0.0
  %817 = vmatpush.msra.mxu0 0.0
  %818 = vmatpush.msra.mxu0 0.0
  %819 = vmatpush.msra.mxu0 0.0
  %820 = vmatpush.msra.mxu0 0.0
  %821 = vmatpush.msra.mxu0 0.0
  %822 = vmatpush.msra.mxu0 0.0
  %823 = vmatpush.msra.mxu0 0.0
  %824 = vmatpush.msra.mxu0 0.0
  %825 = vmatpush.msra.mxu0 0.0
  %826 = vmatpush.msra.mxu0 0.0
  %827 = vmatpush.msra.mxu0 0.0
  %828 = vmatpush.msra.mxu0 0.0
  %829 = vmatpush.msra.mxu0 0.0
  %830 = vmatpush.msra.mxu0 %v813
  %831 = vmatmul.f32.gmra.mxu0 %v789
  %v832 = vpop.f32.mrf.mxu0
  %v833 = vadd.f32 0.0, %v832
  %834 = vmatmul.f32.gmra.mxu0 %v792
  %v835 = vpop.f32.mrf.mxu0
  %v836 = vadd.f32 0.0, %v835
  %837 = vmatmul.f32.gmra.mxu0 %v795
  %v838 = vpop.f32.mrf.mxu0
  %v839 = vadd.f32 0.0, %v838
  %840 = vmatmul.f32.gmra.mxu0 %v798
  %v841 = vpop.f32.mrf.mxu0
  %v842 = vadd.f32 0.0, %v841
  %843 = vmatmul.f32.gmra.mxu0 %v801
  %v844 = vpop.f32.mrf.mxu0
  %v845 = vadd.f32 0.0, %v844
  %846 = vmatmul.f32.gmra.mxu0 %v804
  %v847 = vpop.f32.mrf.mxu0
  %v848 = vadd.f32 0.0, %v847
  %849 = vmatmul.f32.gmra.mxu0 %v807
  %v850 = vpop.f32.mrf.mxu0
  %v851 = vadd.f32 0.0, %v850
  %852 = vmatmul.f32.gmra.mxu0 %v810
  %v853 = vpop.f32.mrf.mxu0
  %v854 = vadd.f32 0.0, %v853
  %855 = vdwg.mxu0
  %v856 = vadd.f32 %v762, %v833
  %v857 = vadd.f32 %v763, %v836
  %v858 = vadd.f32 %v764, %v839
  %v859 = vadd.f32 %v765, %v842
  %v860 = vadd.f32 %v766, %v845
  %v861 = vadd.f32 %v767, %v848
  %v862 = vadd.f32 %v768, %v851
  %v863 = vadd.f32 %v769, %v854
  %s864 = scalar_lea.vmem %s0, 9
  %v865 = vld [vmem:[%s864] ss:$2 sm:$0xff]
  %s866 = scalar_lea.vmem %s0, 25
  %v867 = vld [vmem:[%s866] ss:$2 sm:$0xff]
  %s868 = scalar_lea.vmem %s0, 41
  %v869 = vld [vmem:[%s868] ss:$2 sm:$0xff]
  %s870 = scalar_lea.vmem %s0, 57
  %v871 = vld [vmem:[%s870] ss:$2 sm:$0xff]
  %s872 = scalar_lea.vmem %s0, 89
  %v873 = vld [vmem:[%s872] ss:$2 sm:$0xff]
  %s874 = scalar_lea.vmem %s0, 105
  %v875 = vld [vmem:[%s874] ss:$2 sm:$0xff]
  %s876 = scalar_lea.vmem %s0, 121
  %v877 = vld [vmem:[%s876] ss:$2 sm:$0xff]
  %s878 = scalar_lea.vmem %s0, 137
  %v879 = vld [vmem:[%s878] ss:$2 sm:$0xff]
  %s880 = scalar_lea.vmem %s1, 18
  %v881 = vld [vmem:[%s880] sm:$0x3]
  %v883 = vsel %vm68, %v865, 0
  %v886 = vsel %vm68, %v867, 0
  %v889 = vsel %vm68, %v869, 0
  %v892 = vsel %vm68, %v871, 0
  %v895 = vsel %vm68, %v873, 0
  %v898 = vsel %vm68, %v875, 0
  %v901 = vsel %vm68, %v877, 0
  %v904 = vsel %vm68, %v879, 0
  %v907 = vsel %vm93, %v881, 0
  %909 = vmatpush.msra.mxu0 0.0
  %910 = vmatpush.msra.mxu0 0.0
  %911 = vmatpush.msra.mxu0 0.0
  %912 = vmatpush.msra.mxu0 0.0
  %913 = vmatpush.msra.mxu0 0.0
  %914 = vmatpush.msra.mxu0 0.0
  %915 = vmatpush.msra.mxu0 0.0
  %916 = vmatpush.msra.mxu0 0.0
  %917 = vmatpush.msra.mxu0 0.0
  %918 = vmatpush.msra.mxu0 0.0
  %919 = vmatpush.msra.mxu0 0.0
  %920 = vmatpush.msra.mxu0 0.0
  %921 = vmatpush.msra.mxu0 0.0
  %922 = vmatpush.msra.mxu0 0.0
  %923 = vmatpush.msra.mxu0 0.0
  %924 = vmatpush.msra.mxu0 %v907
  %925 = vmatmul.f32.gmra.mxu0 %v883
  %v926 = vpop.f32.mrf.mxu0
  %v927 = vadd.f32 0.0, %v926
  %928 = vmatmul.f32.gmra.mxu0 %v886
  %v929 = vpop.f32.mrf.mxu0
  %v930 = vadd.f32 0.0, %v929
  %931 = vmatmul.f32.gmra.mxu0 %v889
  %v932 = vpop.f32.mrf.mxu0
  %v933 = vadd.f32 0.0, %v932
  %934 = vmatmul.f32.gmra.mxu0 %v892
  %v935 = vpop.f32.mrf.mxu0
  %v936 = vadd.f32 0.0, %v935
  %937 = vmatmul.f32.gmra.mxu0 %v895
  %v938 = vpop.f32.mrf.mxu0
  %v939 = vadd.f32 0.0, %v938
  %940 = vmatmul.f32.gmra.mxu0 %v898
  %v941 = vpop.f32.mrf.mxu0
  %v942 = vadd.f32 0.0, %v941
  %943 = vmatmul.f32.gmra.mxu0 %v901
  %v944 = vpop.f32.mrf.mxu0
  %v945 = vadd.f32 0.0, %v944
  %946 = vmatmul.f32.gmra.mxu0 %v904
  %v947 = vpop.f32.mrf.mxu0
  %v948 = vadd.f32 0.0, %v947
  %949 = vdwg.mxu0
  %v950 = vadd.f32 %v856, %v927
  %v951 = vadd.f32 %v857, %v930
  %v952 = vadd.f32 %v858, %v933
  %v953 = vadd.f32 %v859, %v936
  %v954 = vadd.f32 %v860, %v939
  %v955 = vadd.f32 %v861, %v942
  %v956 = vadd.f32 %v862, %v945
  %v957 = vadd.f32 %v863, %v948
  %s958 = scalar_lea.vmem %s0, 10
  %v959 = vld [vmem:[%s958] ss:$2 sm:$0xff]
  %s960 = scalar_lea.vmem %s0, 26
  %v961 = vld [vmem:[%s960] ss:$2 sm:$0xff]
  %s962 = scalar_lea.vmem %s0, 42
  %v963 = vld [vmem:[%s962] ss:$2 sm:$0xff]
  %s964 = scalar_lea.vmem %s0, 58
  %v965 = vld [vmem:[%s964] ss:$2 sm:$0xff]
  %s966 = scalar_lea.vmem %s0, 90
  %v967 = vld [vmem:[%s966] ss:$2 sm:$0xff]
  %s968 = scalar_lea.vmem %s0, 106
  %v969 = vld [vmem:[%s968] ss:$2 sm:$0xff]
  %s970 = scalar_lea.vmem %s0, 122
  %v971 = vld [vmem:[%s970] ss:$2 sm:$0xff]
  %s972 = scalar_lea.vmem %s0, 138
  %v973 = vld [vmem:[%s972] ss:$2 sm:$0xff]
  %s974 = scalar_lea.vmem %s1, 20
  %v975 = vld [vmem:[%s974] sm:$0x3]
  %v977 = vsel %vm68, %v959, 0
  %v980 = vsel %vm68, %v961, 0
  %v983 = vsel %vm68, %v963, 0
  %v986 = vsel %vm68, %v965, 0
  %v989 = vsel %vm68, %v967, 0
  %v992 = vsel %vm68, %v969, 0
  %v995 = vsel %vm68, %v971, 0
  %v998 = vsel %vm68, %v973, 0
  %v1001 = vsel %vm93, %v975, 0
  %1003 = vmatpush.msra.mxu0 0.0
  %1004 = vmatpush.msra.mxu0 0.0
  %1005 = vmatpush.msra.mxu0 0.0
  %1006 = vmatpush.msra.mxu0 0.0
  %1007 = vmatpush.msra.mxu0 0.0
  %1008 = vmatpush.msra.mxu0 0.0
  %1009 = vmatpush.msra.mxu0 0.0
  %1010 = vmatpush.msra.mxu0 0.0
  %1011 = vmatpush.msra.mxu0 0.0
  %1012 = vmatpush.msra.mxu0 0.0
  %1013 = vmatpush.msra.mxu0 0.0
  %1014 = vmatpush.msra.mxu0 0.0
  %1015 = vmatpush.msra.mxu0 0.0
  %1016 = vmatpush.msra.mxu0 0.0
  %1017 = vmatpush.msra.mxu0 0.0
  %1018 = vmatpush.msra.mxu0 %v1001
  %1019 = vmatmul.f32.gmra.mxu0 %v977
  %v1020 = vpop.f32.mrf.mxu0
  %v1021 = vadd.f32 0.0, %v1020
  %1022 = vmatmul.f32.gmra.mxu0 %v980
  %v1023 = vpop.f32.mrf.mxu0
  %v1024 = vadd.f32 0.0, %v1023
  %1025 = vmatmul.f32.gmra.mxu0 %v983
  %v1026 = vpop.f32.mrf.mxu0
  %v1027 = vadd.f32 0.0, %v1026
  %1028 = vmatmul.f32.gmra.mxu0 %v986
  %v1029 = vpop.f32.mrf.mxu0
  %v1030 = vadd.f32 0.0, %v1029
  %1031 = vmatmul.f32.gmra.mxu0 %v989
  %v1032 = vpop.f32.mrf.mxu0
  %v1033 = vadd.f32 0.0, %v1032
  %1034 = vmatmul.f32.gmra.mxu0 %v992
  %v1035 = vpop.f32.mrf.mxu0
  %v1036 = vadd.f32 0.0, %v1035
  %1037 = vmatmul.f32.gmra.mxu0 %v995
  %v1038 = vpop.f32.mrf.mxu0
  %v1039 = vadd.f32 0.0, %v1038
  %1040 = vmatmul.f32.gmra.mxu0 %v998
  %v1041 = vpop.f32.mrf.mxu0
  %v1042 = vadd.f32 0.0, %v1041
  %1043 = vdwg.mxu0
  %v1044 = vadd.f32 %v950, %v1021
  %v1045 = vadd.f32 %v951, %v1024
  %v1046 = vadd.f32 %v952, %v1027
  %v1047 = vadd.f32 %v953, %v1030
  %v1048 = vadd.f32 %v954, %v1033
  %v1049 = vadd.f32 %v955, %v1036
  %v1050 = vadd.f32 %v956, %v1039
  %v1051 = vadd.f32 %v957, %v1042
  %s1052 = scalar_lea.vmem %s0, 11
  %v1053 = vld [vmem:[%s1052] ss:$2 sm:$0xff]
  %s1054 = scalar_lea.vmem %s0, 27
  %v1055 = vld [vmem:[%s1054] ss:$2 sm:$0xff]
  %s1056 = scalar_lea.vmem %s0, 43
  %v1057 = vld [vmem:[%s1056] ss:$2 sm:$0xff]
  %s1058 = scalar_lea.vmem %s0, 59
  %v1059 = vld [vmem:[%s1058] ss:$2 sm:$0xff]
  %s1060 = scalar_lea.vmem %s0, 91
  %v1061 = vld [vmem:[%s1060] ss:$2 sm:$0xff]
  %s1062 = scalar_lea.vmem %s0, 107
  %v1063 = vld [vmem:[%s1062] ss:$2 sm:$0xff]
  %s1064 = scalar_lea.vmem %s0, 123
  %v1065 = vld [vmem:[%s1064] ss:$2 sm:$0xff]
  %s1066 = scalar_lea.vmem %s0, 139
  %v1067 = vld [vmem:[%s1066] ss:$2 sm:$0xff]
  %s1068 = scalar_lea.vmem %s1, 22
  %v1069 = vld [vmem:[%s1068] sm:$0x3]
  %v1071 = vsel %vm68, %v1053, 0
  %v1074 = vsel %vm68, %v1055, 0
  %v1077 = vsel %vm68, %v1057, 0
  %v1080 = vsel %vm68, %v1059, 0
  %v1083 = vsel %vm68, %v1061, 0
  %v1086 = vsel %vm68, %v1063, 0
  %v1089 = vsel %vm68, %v1065, 0
  %v1092 = vsel %vm68, %v1067, 0
  %v1095 = vsel %vm93, %v1069, 0
  %1097 = vmatpush.msra.mxu0 0.0
  %1098 = vmatpush.msra.mxu0 0.0
  %1099 = vmatpush.msra.mxu0 0.0
  %1100 = vmatpush.msra.mxu0 0.0
  %1101 = vmatpush.msra.mxu0 0.0
  %1102 = vmatpush.msra.mxu0 0.0
  %1103 = vmatpush.msra.mxu0 0.0
  %1104 = vmatpush.msra.mxu0 0.0
  %1105 = vmatpush.msra.mxu0 0.0
  %1106 = vmatpush.msra.mxu0 0.0
  %1107 = vmatpush.msra.mxu0 0.0
  %1108 = vmatpush.msra.mxu0 0.0
  %1109 = vmatpush.msra.mxu0 0.0
  %1110 = vmatpush.msra.mxu0 0.0
  %1111 = vmatpush.msra.mxu0 0.0
  %1112 = vmatpush.msra.mxu0 %v1095
  %1113 = vmatmul.f32.gmra.mxu0 %v1071
  %v1114 = vpop.f32.mrf.mxu0
  %v1115 = vadd.f32 0.0, %v1114
  %1116 = vmatmul.f32.gmra.mxu0 %v1074
  %v1117 = vpop.f32.mrf.mxu0
  %v1118 = vadd.f32 0.0, %v1117
  %1119 = vmatmul.f32.gmra.mxu0 %v1077
  %v1120 = vpop.f32.mrf.mxu0
  %v1121 = vadd.f32 0.0, %v1120
  %1122 = vmatmul.f32.gmra.mxu0 %v1080
  %v1123 = vpop.f32.mrf.mxu0
  %v1124 = vadd.f32 0.0, %v1123
  %1125 = vmatmul.f32.gmra.mxu0 %v1083
  %v1126 = vpop.f32.mrf.mxu0
  %v1127 = vadd.f32 0.0, %v1126
  %1128 = vmatmul.f32.gmra.mxu0 %v1086
  %v1129 = vpop.f32.mrf.mxu0
  %v1130 = vadd.f32 0.0, %v1129
  %1131 = vmatmul.f32.gmra.mxu0 %v1089
  %v1132 = vpop.f32.mrf.mxu0
  %v1133 = vadd.f32 0.0, %v1132
  %1134 = vmatmul.f32.gmra.mxu0 %v1092
  %v1135 = vpop.f32.mrf.mxu0
  %v1136 = vadd.f32 0.0, %v1135
  %1137 = vdwg.mxu0
  %v1138 = vadd.f32 %v1044, %v1115
  %v1139 = vadd.f32 %v1045, %v1118
  %v1140 = vadd.f32 %v1046, %v1121
  %v1141 = vadd.f32 %v1047, %v1124
  %v1142 = vadd.f32 %v1048, %v1127
  %v1143 = vadd.f32 %v1049, %v1130
  %v1144 = vadd.f32 %v1050, %v1133
  %v1145 = vadd.f32 %v1051, %v1136
  %s1146 = scalar_lea.vmem %s0, 12
  %v1147 = vld [vmem:[%s1146] ss:$2 sm:$0xff]
  %s1148 = scalar_lea.vmem %s0, 28
  %v1149 = vld [vmem:[%s1148] ss:$2 sm:$0xff]
  %s1150 = scalar_lea.vmem %s0, 44
  %v1151 = vld [vmem:[%s1150] ss:$2 sm:$0xff]
  %s1152 = scalar_lea.vmem %s0, 60
  %v1153 = vld [vmem:[%s1152] ss:$2 sm:$0xff]
  %s1154 = scalar_lea.vmem %s0, 92
  %v1155 = vld [vmem:[%s1154] ss:$2 sm:$0xff]
  %s1156 = scalar_lea.vmem %s0, 108
  %v1157 = vld [vmem:[%s1156] ss:$2 sm:$0xff]
  %s1158 = scalar_lea.vmem %s0, 124
  %v1159 = vld [vmem:[%s1158] ss:$2 sm:$0xff]
  %s1160 = scalar_lea.vmem %s0, 140
  %v1161 = vld [vmem:[%s1160] ss:$2 sm:$0xff]
  %s1162 = scalar_lea.vmem %s1, 24
  %v1163 = vld [vmem:[%s1162] sm:$0x3]
  %v1165 = vsel %vm68, %v1147, 0
  %v1168 = vsel %vm68, %v1149, 0
  %v1171 = vsel %vm68, %v1151, 0
  %v1174 = vsel %vm68, %v1153, 0
  %v1177 = vsel %vm68, %v1155, 0
  %v1180 = vsel %vm68, %v1157, 0
  %v1183 = vsel %vm68, %v1159, 0
  %v1186 = vsel %vm68, %v1161, 0
  %v1189 = vsel %vm93, %v1163, 0
  %1191 = vmatpush.msra.mxu0 0.0
  %1192 = vmatpush.msra.mxu0 0.0
  %1193 = vmatpush.msra.mxu0 0.0
  %1194 = vmatpush.msra.mxu0 0.0
  %1195 = vmatpush.msra.mxu0 0.0
  %1196 = vmatpush.msra.mxu0 0.0
  %1197 = vmatpush.msra.mxu0 0.0
  %1198 = vmatpush.msra.mxu0 0.0
  %1199 = vmatpush.msra.mxu0 0.0
  %1200 = vmatpush.msra.mxu0 0.0
  %1201 = vmatpush.msra.mxu0 0.0
  %1202 = vmatpush.msra.mxu0 0.0
  %1203 = vmatpush.msra.mxu0 0.0
  %1204 = vmatpush.msra.mxu0 0.0
  %1205 = vmatpush.msra.mxu0 0.0
  %1206 = vmatpush.msra.mxu0 %v1189
  %1207 = vmatmul.f32.gmra.mxu0 %v1165
  %v1208 = vpop.f32.mrf.mxu0
  %v1209 = vadd.f32 0.0, %v1208
  %1210 = vmatmul.f32.gmra.mxu0 %v1168
  %v1211 = vpop.f32.mrf.mxu0
  %v1212 = vadd.f32 0.0, %v1211
  %1213 = vmatmul.f32.gmra.mxu0 %v1171
  %v1214 = vpop.f32.mrf.mxu0
  %v1215 = vadd.f32 0.0, %v1214
  %1216 = vmatmul.f32.gmra.mxu0 %v1174
  %v1217 = vpop.f32.mrf.mxu0
  %v1218 = vadd.f32 0.0, %v1217
  %1219 = vmatmul.f32.gmra.mxu0 %v1177
  %v1220 = vpop.f32.mrf.mxu0
  %v1221 = vadd.f32 0.0, %v1220
  %1222 = vmatmul.f32.gmra.mxu0 %v1180
  %v1223 = vpop.f32.mrf.mxu0
  %v1224 = vadd.f32 0.0, %v1223
  %1225 = vmatmul.f32.gmra.mxu0 %v1183
  %v1226 = vpop.f32.mrf.mxu0
  %v1227 = vadd.f32 0.0, %v1226
  %1228 = vmatmul.f32.gmra.mxu0 %v1186
  %v1229 = vpop.f32.mrf.mxu0
  %v1230 = vadd.f32 0.0, %v1229
  %1231 = vdwg.mxu0
  %v1232 = vadd.f32 %v1138, %v1209
  %v1233 = vadd.f32 %v1139, %v1212
  %v1234 = vadd.f32 %v1140, %v1215
  %v1235 = vadd.f32 %v1141, %v1218
  %v1236 = vadd.f32 %v1142, %v1221
  %v1237 = vadd.f32 %v1143, %v1224
  %v1238 = vadd.f32 %v1144, %v1227
  %v1239 = vadd.f32 %v1145, %v1230
  %s1240 = scalar_lea.vmem %s0, 13
  %v1241 = vld [vmem:[%s1240] ss:$2 sm:$0xff]
  %s1242 = scalar_lea.vmem %s0, 29
  %v1243 = vld [vmem:[%s1242] ss:$2 sm:$0xff]
  %s1244 = scalar_lea.vmem %s0, 45
  %v1245 = vld [vmem:[%s1244] ss:$2 sm:$0xff]
  %s1246 = scalar_lea.vmem %s0, 61
  %v1247 = vld [vmem:[%s1246] ss:$2 sm:$0xff]
  %s1248 = scalar_lea.vmem %s0, 93
  %v1249 = vld [vmem:[%s1248] ss:$2 sm:$0xff]
  %s1250 = scalar_lea.vmem %s0, 109
  %v1251 = vld [vmem:[%s1250] ss:$2 sm:$0xff]
  %s1252 = scalar_lea.vmem %s0, 125
  %v1253 = vld [vmem:[%s1252] ss:$2 sm:$0xff]
  %s1254 = scalar_lea.vmem %s0, 141
  %v1255 = vld [vmem:[%s1254] ss:$2 sm:$0xff]
  %s1256 = scalar_lea.vmem %s1, 26
  %v1257 = vld [vmem:[%s1256] sm:$0x3]
  %v1259 = vsel %vm68, %v1241, 0
  %v1262 = vsel %vm68, %v1243, 0
  %v1265 = vsel %vm68, %v1245, 0
  %v1268 = vsel %vm68, %v1247, 0
  %v1271 = vsel %vm68, %v1249, 0
  %v1274 = vsel %vm68, %v1251, 0
  %v1277 = vsel %vm68, %v1253, 0
  %v1280 = vsel %vm68, %v1255, 0
  %v1283 = vsel %vm93, %v1257, 0
  %1285 = vmatpush.msra.mxu0 0.0
  %1286 = vmatpush.msra.mxu0 0.0
  %1287 = vmatpush.msra.mxu0 0.0
  %1288 = vmatpush.msra.mxu0 0.0
  %1289 = vmatpush.msra.mxu0 0.0
  %1290 = vmatpush.msra.mxu0 0.0
  %1291 = vmatpush.msra.mxu0 0.0
  %1292 = vmatpush.msra.mxu0 0.0
  %1293 = vmatpush.msra.mxu0 0.0
  %1294 = vmatpush.msra.mxu0 0.0
  %1295 = vmatpush.msra.mxu0 0.0
  %1296 = vmatpush.msra.mxu0 0.0
  %1297 = vmatpush.msra.mxu0 0.0
  %1298 = vmatpush.msra.mxu0 0.0
  %1299 = vmatpush.msra.mxu0 0.0
  %1300 = vmatpush.msra.mxu0 %v1283
  %1301 = vmatmul.f32.gmra.mxu0 %v1259
  %v1302 = vpop.f32.mrf.mxu0
  %v1303 = vadd.f32 0.0, %v1302
  %1304 = vmatmul.f32.gmra.mxu0 %v1262
  %v1305 = vpop.f32.mrf.mxu0
  %v1306 = vadd.f32 0.0, %v1305
  %1307 = vmatmul.f32.gmra.mxu0 %v1265
  %v1308 = vpop.f32.mrf.mxu0
  %v1309 = vadd.f32 0.0, %v1308
  %1310 = vmatmul.f32.gmra.mxu0 %v1268
  %v1311 = vpop.f32.mrf.mxu0
  %v1312 = vadd.f32 0.0, %v1311
  %1313 = vmatmul.f32.gmra.mxu0 %v1271
  %v1314 = vpop.f32.mrf.mxu0
  %v1315 = vadd.f32 0.0, %v1314
  %1316 = vmatmul.f32.gmra.mxu0 %v1274
  %v1317 = vpop.f32.mrf.mxu0
  %v1318 = vadd.f32 0.0, %v1317
  %1319 = vmatmul.f32.gmra.mxu0 %v1277
  %v1320 = vpop.f32.mrf.mxu0
  %v1321 = vadd.f32 0.0, %v1320
  %1322 = vmatmul.f32.gmra.mxu0 %v1280
  %v1323 = vpop.f32.mrf.mxu0
  %v1324 = vadd.f32 0.0, %v1323
  %1325 = vdwg.mxu0
  %v1326 = vadd.f32 %v1232, %v1303
  %v1327 = vadd.f32 %v1233, %v1306
  %v1328 = vadd.f32 %v1234, %v1309
  %v1329 = vadd.f32 %v1235, %v1312
  %v1330 = vadd.f32 %v1236, %v1315
  %v1331 = vadd.f32 %v1237, %v1318
  %v1332 = vadd.f32 %v1238, %v1321
  %v1333 = vadd.f32 %v1239, %v1324
  %s1334 = scalar_lea.vmem %s0, 14
  %v1335 = vld [vmem:[%s1334] ss:$2 sm:$0xff]
  %s1336 = scalar_lea.vmem %s0, 30
  %v1337 = vld [vmem:[%s1336] ss:$2 sm:$0xff]
  %s1338 = scalar_lea.vmem %s0, 46
  %v1339 = vld [vmem:[%s1338] ss:$2 sm:$0xff]
  %s1340 = scalar_lea.vmem %s0, 62
  %v1341 = vld [vmem:[%s1340] ss:$2 sm:$0xff]
  %s1342 = scalar_lea.vmem %s0, 94
  %v1343 = vld [vmem:[%s1342] ss:$2 sm:$0xff]
  %s1344 = scalar_lea.vmem %s0, 110
  %v1345 = vld [vmem:[%s1344] ss:$2 sm:$0xff]
  %s1346 = scalar_lea.vmem %s0, 126
  %v1347 = vld [vmem:[%s1346] ss:$2 sm:$0xff]
  %s1348 = scalar_lea.vmem %s0, 142
  %v1349 = vld [vmem:[%s1348] ss:$2 sm:$0xff]
  %s1350 = scalar_lea.vmem %s1, 28
  %v1351 = vld [vmem:[%s1350] sm:$0x3]
  %v1353 = vsel %vm68, %v1335, 0
  %v1356 = vsel %vm68, %v1337, 0
  %v1359 = vsel %vm68, %v1339, 0
  %v1362 = vsel %vm68, %v1341, 0
  %v1365 = vsel %vm68, %v1343, 0
  %v1368 = vsel %vm68, %v1345, 0
  %v1371 = vsel %vm68, %v1347, 0
  %v1374 = vsel %vm68, %v1349, 0
  %v1377 = vsel %vm93, %v1351, 0
  %1379 = vmatpush.msra.mxu0 0.0
  %1380 = vmatpush.msra.mxu0 0.0
  %1381 = vmatpush.msra.mxu0 0.0
  %1382 = vmatpush.msra.mxu0 0.0
  %1383 = vmatpush.msra.mxu0 0.0
  %1384 = vmatpush.msra.mxu0 0.0
  %1385 = vmatpush.msra.mxu0 0.0
  %1386 = vmatpush.msra.mxu0 0.0
  %1387 = vmatpush.msra.mxu0 0.0
  %1388 = vmatpush.msra.mxu0 0.0
  %1389 = vmatpush.msra.mxu0 0.0
  %1390 = vmatpush.msra.mxu0 0.0
  %1391 = vmatpush.msra.mxu0 0.0
  %1392 = vmatpush.msra.mxu0 0.0
  %1393 = vmatpush.msra.mxu0 0.0
  %1394 = vmatpush.msra.mxu0 %v1377
  %1395 = vmatmul.f32.gmra.mxu0 %v1353
  %v1396 = vpop.f32.mrf.mxu0
  %v1397 = vadd.f32 0.0, %v1396
  %1398 = vmatmul.f32.gmra.mxu0 %v1356
  %v1399 = vpop.f32.mrf.mxu0
  %v1400 = vadd.f32 0.0, %v1399
  %1401 = vmatmul.f32.gmra.mxu0 %v1359
  %v1402 = vpop.f32.mrf.mxu0
  %v1403 = vadd.f32 0.0, %v1402
  %1404 = vmatmul.f32.gmra.mxu0 %v1362
  %v1405 = vpop.f32.mrf.mxu0
  %v1406 = vadd.f32 0.0, %v1405
  %1407 = vmatmul.f32.gmra.mxu0 %v1365
  %v1408 = vpop.f32.mrf.mxu0
  %v1409 = vadd.f32 0.0, %v1408
  %1410 = vmatmul.f32.gmra.mxu0 %v1368
  %v1411 = vpop.f32.mrf.mxu0
  %v1412 = vadd.f32 0.0, %v1411
  %1413 = vmatmul.f32.gmra.mxu0 %v1371
  %v1414 = vpop.f32.mrf.mxu0
  %v1415 = vadd.f32 0.0, %v1414
  %1416 = vmatmul.f32.gmra.mxu0 %v1374
  %v1417 = vpop.f32.mrf.mxu0
  %v1418 = vadd.f32 0.0, %v1417
  %1419 = vdwg.mxu0
  %v1420 = vadd.f32 %v1326, %v1397
  %v1421 = vadd.f32 %v1327, %v1400
  %v1422 = vadd.f32 %v1328, %v1403
  %v1423 = vadd.f32 %v1329, %v1406
  %v1424 = vadd.f32 %v1330, %v1409
  %v1425 = vadd.f32 %v1331, %v1412
  %v1426 = vadd.f32 %v1332, %v1415
  %v1427 = vadd.f32 %v1333, %v1418
  %s1428 = scalar_lea.vmem %s0, 15
  %v1429 = vld [vmem:[%s1428] ss:$2 sm:$0xff]
  %s1430 = scalar_lea.vmem %s0, 31
  %v1431 = vld [vmem:[%s1430] ss:$2 sm:$0xff]
  %s1432 = scalar_lea.vmem %s0, 47
  %v1433 = vld [vmem:[%s1432] ss:$2 sm:$0xff]
  %s1434 = scalar_lea.vmem %s0, 63
  %v1435 = vld [vmem:[%s1434] ss:$2 sm:$0xff]
  %s1436 = scalar_lea.vmem %s0, 95
  %v1437 = vld [vmem:[%s1436] ss:$2 sm:$0xff]
  %s1438 = scalar_lea.vmem %s0, 111
  %v1439 = vld [vmem:[%s1438] ss:$2 sm:$0xff]
  %s1440 = scalar_lea.vmem %s0, 127
  %v1441 = vld [vmem:[%s1440] ss:$2 sm:$0xff]
  %s1442 = scalar_lea.vmem %s0, 143
  %v1443 = vld [vmem:[%s1442] ss:$2 sm:$0xff]
  %s1444 = scalar_lea.vmem %s1, 30
  %v1445 = vld [vmem:[%s1444] sm:$0x3]
  %v1447 = vsel %vm68, %v1429, 0
  %v1450 = vsel %vm68, %v1431, 0
  %v1453 = vsel %vm68, %v1433, 0
  %v1456 = vsel %vm68, %v1435, 0
  %v1459 = vsel %vm68, %v1437, 0
  %v1462 = vsel %vm68, %v1439, 0
  %v1465 = vsel %vm68, %v1441, 0
  %v1468 = vsel %vm68, %v1443, 0
  %v1471 = vsel %vm93, %v1445, 0
  %1473 = vmatpush.msra.mxu0 0.0
  %1474 = vmatpush.msra.mxu0 0.0
  %1475 = vmatpush.msra.mxu0 0.0
  %1476 = vmatpush.msra.mxu0 0.0
  %1477 = vmatpush.msra.mxu0 0.0
  %1478 = vmatpush.msra.mxu0 0.0
  %1479 = vmatpush.msra.mxu0 0.0
  %1480 = vmatpush.msra.mxu0 0.0
  %1481 = vmatpush.msra.mxu0 0.0
  %1482 = vmatpush.msra.mxu0 0.0
  %1483 = vmatpush.msra.mxu0 0.0
  %1484 = vmatpush.msra.mxu0 0.0
  %1485 = vmatpush.msra.mxu0 0.0
  %1486 = vmatpush.msra.mxu0 0.0
  %1487 = vmatpush.msra.mxu0 0.0
  %1488 = vmatpush.msra.mxu0 %v1471
  %1489 = vmatmul.f32.gmra.mxu0 %v1447
  %v1490 = vpop.f32.mrf.mxu0
  %v1491 = vadd.f32 0.0, %v1490
  %1492 = vmatmul.f32.gmra.mxu0 %v1450
  %v1493 = vpop.f32.mrf.mxu0
  %v1494 = vadd.f32 0.0, %v1493
  %1495 = vmatmul.f32.gmra.mxu0 %v1453
  %v1496 = vpop.f32.mrf.mxu0
  %v1497 = vadd.f32 0.0, %v1496
  %1498 = vmatmul.f32.gmra.mxu0 %v1456
  %v1499 = vpop.f32.mrf.mxu0
  %v1500 = vadd.f32 0.0, %v1499
  %1501 = vmatmul.f32.gmra.mxu0 %v1459
  %v1502 = vpop.f32.mrf.mxu0
  %v1503 = vadd.f32 0.0, %v1502
  %1504 = vmatmul.f32.gmra.mxu0 %v1462
  %v1505 = vpop.f32.mrf.mxu0
  %v1506 = vadd.f32 0.0, %v1505
  %1507 = vmatmul.f32.gmra.mxu0 %v1465
  %v1508 = vpop.f32.mrf.mxu0
  %v1509 = vadd.f32 0.0, %v1508
  %1510 = vmatmul.f32.gmra.mxu0 %v1468
  %v1511 = vpop.f32.mrf.mxu0
  %v1512 = vadd.f32 0.0, %v1511
  %1513 = vdwg.mxu0
  %v1514 = vadd.f32 %v1420, %v1491
  %v1515 = vadd.f32 %v1421, %v1494
  %v1516 = vadd.f32 %v1422, %v1497
  %v1517 = vadd.f32 %v1423, %v1500
  %v1518 = vadd.f32 %v1424, %v1503
  %v1519 = vadd.f32 %v1425, %v1506
  %v1520 = vadd.f32 %v1426, %v1509
  %v1521 = vadd.f32 %v1427, %v1512
  %v1522 = vld [vmem:[%s2] sm:$0x1]
  %v1524 = vperm.slane %v1522, 0
  %v1526 = vadd.f32 %v1514, %v1524
  %v1527 = vadd.f32 %v1515, %v1524
  %v1528 = vadd.f32 %v1516, %v1524
  %v1529 = vadd.f32 %v1517, %v1524
  %v1530 = vadd.f32 %v1518, %v1524
  %v1531 = vadd.f32 %v1519, %v1524
  %v1532 = vadd.f32 %v1520, %v1524
  %v1533 = vadd.f32 %v1521, %v1524
  %v1534 = vmul.f32 %v1526, 0.2
  %v1535 = vmul.f32 %v1527, 0.2
  %v1536 = vmul.f32 %v1528, 0.2
  %v1537 = vmul.f32 %v1529, 0.2
  %v1538 = vmul.f32 %v1530, 0.2
  %v1539 = vmul.f32 %v1531, 0.2
  %v1540 = vmul.f32 %v1532, 0.2
  %v1541 = vmul.f32 %v1533, 0.2
  %v1542 = vmax.f32 %v1526, %v1534
  %v1543 = vmax.f32 %v1527, %v1535
  %v1544 = vmax.f32 %v1528, %v1536
  %v1545 = vmax.f32 %v1529, %v1537
  %v1546 = vmax.f32 %v1530, %v1538
  %v1547 = vmax.f32 %v1531, %v1539
  %v1548 = vmax.f32 %v1532, %v1540
  %v1549 = vmax.f32 %v1533, %v1541
  %vm1550 = vcmask 64512
  %1551 = vst.msk [vmem:[#allocation2] sm:$0xff] %vm1550, 0.0
  %1552 = vst.msk [vmem:[#allocation2 + $0x8] sm:$0xff] %vm1550, 0.0
  %1553 = vst.msk [vmem:[#allocation2 + $0x10] sm:$0xff] %vm1550, 0.0
  %1554 = vst.msk [vmem:[#allocation2 + $0x18] sm:$0xff] %vm1550, 0.0
  %vm1555 = vcmask 62464
  %1556 = vst.msk [vmem:[#allocation2 + $0x20] sm:$0x3f] %vm1555, 0.0
  %1557 = vst.msk [vmem:[#allocation2 + $0x28] sm:$0xff] %vm1550, 0.0
  %1558 = vst.msk [vmem:[#allocation2 + $0x30] sm:$0xff] %vm1550, 0.0
  %1559 = vst.msk [vmem:[#allocation2 + $0x38] sm:$0xff] %vm1550, 0.0
  %1560 = vst.msk [vmem:[#allocation2 + $0x40] sm:$0xff] %vm1550, 0.0
  %1561 = vst.msk [vmem:[#allocation2 + $0x48] sm:$0x3f] %vm1555, 0.0
  %1562 = vst.msk [vmem:[#allocation2 + $0x3] sm:$0xff] %vm1550, %v1542
  %1563 = vst.msk [vmem:[#allocation2 + $0xb] sm:$0xff] %vm1550, %v1543
  %1564 = vst.msk [vmem:[#allocation2 + $0x13] sm:$0xff] %vm1550, %v1544
  %1565 = vst.msk [vmem:[#allocation2 + $0x1b] sm:$0xff] %vm1550, %v1545
  %1566 = vst.msk [vmem:[#allocation2 + $0x2b] sm:$0xff] %vm1550, %v1546
  %1567 = vst.msk [vmem:[#allocation2 + $0x33] sm:$0xff] %vm1550, %v1547
  %1568 = vst.msk [vmem:[#allocation2 + $0x3b] sm:$0xff] %vm1550, %v1548
  %1569 = vst.msk [vmem:[#allocation2 + $0x43] sm:$0xff] %vm1550, %v1549
  %v1570 = vld [vmem:[#allocation2] ss:$2 sm:$0xff]
  %s1571 = scalar_lea.vmem [#allocation2], 16
  %v1572 = vld [vmem:[%s1571] ss:$2 sm:$0xff]
  %s1573 = scalar_lea.vmem [#allocation2], 40
  %v1574 = vld [vmem:[%s1573] ss:$2 sm:$0xff]
  %s1575 = scalar_lea.vmem [#allocation2], 56
  %v1576 = vld [vmem:[%s1575] ss:$2 sm:$0xff]
  %v1577 = vld [vmem:[%s3] sm:$0xff]
  %s1578 = scalar_lea.vmem [#allocation2], 1
  %v1579 = vld [vmem:[%s1578] ss:$2 sm:$0xff]
  %s1580 = scalar_lea.vmem [#allocation2], 17
  %v1581 = vld [vmem:[%s1580] ss:$2 sm:$0xff]
  %s1582 = scalar_lea.vmem [#allocation2], 41
  %v1583 = vld [vmem:[%s1582] ss:$2 sm:$0xff]
  %s1584 = scalar_lea.vmem [#allocation2], 57
  %v1585 = vld [vmem:[%s1584] ss:$2 sm:$0xff]
  %s1586 = scalar_lea.vmem %s3, 8
  %v1587 = vld [vmem:[%s1586] sm:$0xff]
  %v1589 = vsel %vm1550, %v1579, 0
  %v1592 = vsel %vm1550, %v1581, 0
  %v1595 = vsel %vm1550, %v1583, 0
  %v1598 = vsel %vm1550, %v1585, 0
  %1600 = vmatpush.msra.mxu0 0.0
  %1601 = vmatpush.msra.mxu0 0.0
  %1602 = vmatpush.msra.mxu0 0.0
  %1603 = vmatpush.msra.mxu0 0.0
  %1604 = vmatpush.msra.mxu0 0.0
  %1605 = vmatpush.msra.mxu0 0.0
  %1606 = vmatpush.msra.mxu0 0.0
  %1607 = vmatpush.msra.mxu0 0.0
  %1608 = vmatpush.msra.mxu0 0.0
  %1609 = vmatpush.msra.mxu0 0.0
  %1610 = vmatpush.msra.mxu0 0.0
  %1611 = vmatpush.msra.mxu0 0.0
  %1612 = vmatpush.msra.mxu0 0.0
  %1613 = vmatpush.msra.mxu0 0.0
  %1614 = vmatpush.msra.mxu0 0.0
  %1615 = vmatpush.msra.mxu0 %v1587
  %1616 = vmatmul.f32.gmra.mxu0 %v1589
  %v1617 = vpop.f32.mrf.mxu0
  %v1618 = vadd.f32 0.0, %v1617
  %1619 = vmatmul.f32.gmra.mxu0 %v1592
  %v1620 = vpop.f32.mrf.mxu0
  %v1621 = vadd.f32 0.0, %v1620
  %1622 = vmatmul.f32.gmra.mxu0 %v1595
  %v1623 = vpop.f32.mrf.mxu0
  %v1624 = vadd.f32 0.0, %v1623
  %1625 = vmatmul.f32.gmra.mxu0 %v1598
  %v1626 = vpop.f32.mrf.mxu0
  %v1627 = vadd.f32 0.0, %v1626
  %1628 = vdwg.mxu0
  %v1630 = vsel %vm1550, %v1570, 0
  %v1633 = vsel %vm1550, %v1572, 0
  %v1636 = vsel %vm1550, %v1574, 0
  %v1639 = vsel %vm1550, %v1576, 0
  %1641 = vmatpush.msra.mxu0 0.0
  %1642 = vmatpush.msra.mxu0 0.0
  %1643 = vmatpush.msra.mxu0 0.0
  %1644 = vmatpush.msra.mxu0 0.0
  %1645 = vmatpush.msra.mxu0 0.0
  %1646 = vmatpush.msra.mxu0 0.0
  %1647 = vmatpush.msra.mxu0 0.0
  %1648 = vmatpush.msra.mxu0 0.0
  %1649 = vmatpush.msra.mxu0 0.0
  %1650 = vmatpush.msra.mxu0 0.0
  %1651 = vmatpush.msra.mxu0 0.0
  %1652 = vmatpush.msra.mxu0 0.0
  %1653 = vmatpush.msra.mxu0 0.0
  %1654 = vmatpush.msra.mxu0 0.0
  %1655 = vmatpush.msra.mxu0 0.0
  %1656 = vmatpush.msra.mxu0 %v1577
  %1657 = vmatmul.f32.gmra.mxu0 %v1630
  %v1658 = vpop.f32.mrf.mxu0
  %v1659 = vadd.f32 %v1618, %v1658
  %1660 = vmatmul.f32.gmra.mxu0 %v1633
  %v1661 = vpop.f32.mrf.mxu0
  %v1662 = vadd.f32 %v1621, %v1661
  %1663 = vmatmul.f32.gmra.mxu0 %v1636
  %v1664 = vpop.f32.mrf.mxu0
  %v1665 = vadd.f32 %v1624, %v1664
  %1666 = vmatmul.f32.gmra.mxu0 %v1639
  %v1667 = vpop.f32.mrf.mxu0
  %v1668 = vadd.f32 %v1627, %v1667
  %1669 = vdwg.mxu0
  %s1670 = scalar_lea.vmem [#allocation2], 2
  %v1671 = vld [vmem:[%s1670] ss:$2 sm:$0xff]
  %s1672 = scalar_lea.vmem [#allocation2], 18
  %v1673 = vld [vmem:[%s1672] ss:$2 sm:$0xff]
  %s1674 = scalar_lea.vmem [#allocation2], 42
  %v1675 = vld [vmem:[%s1674] ss:$2 sm:$0xff]
  %s1676 = scalar_lea.vmem [#allocation2], 58
  %v1677 = vld [vmem:[%s1676] ss:$2 sm:$0xff]
  %s1678 = scalar_lea.vmem %s3, 16
  %v1679 = vld [vmem:[%s1678] sm:$0xff]
  %v1681 = vsel %vm1550, %v1671, 0
  %v1684 = vsel %vm1550, %v1673, 0
  %v1687 = vsel %vm1550, %v1675, 0
  %v1690 = vsel %vm1550, %v1677, 0
  %1692 = vmatpush.msra.mxu0 0.0
  %1693 = vmatpush.msra.mxu0 0.0
  %1694 = vmatpush.msra.mxu0 0.0
  %1695 = vmatpush.msra.mxu0 0.0
  %1696 = vmatpush.msra.mxu0 0.0
  %1697 = vmatpush.msra.mxu0 0.0
  %1698 = vmatpush.msra.mxu0 0.0
  %1699 = vmatpush.msra.mxu0 0.0
  %1700 = vmatpush.msra.mxu0 0.0
  %1701 = vmatpush.msra.mxu0 0.0
  %1702 = vmatpush.msra.mxu0 0.0
  %1703 = vmatpush.msra.mxu0 0.0
  %1704 = vmatpush.msra.mxu0 0.0
  %1705 = vmatpush.msra.mxu0 0.0
  %1706 = vmatpush.msra.mxu0 0.0
  %1707 = vmatpush.msra.mxu0 %v1679
  %1708 = vmatmul.f32.gmra.mxu0 %v1681
  %v1709 = vpop.f32.mrf.mxu0
  %v1710 = vadd.f32 0.0, %v1709
  %1711 = vmatmul.f32.gmra.mxu0 %v1684
  %v1712 = vpop.f32.mrf.mxu0
  %v1713 = vadd.f32 0.0, %v1712
  %1714 = vmatmul.f32.gmra.mxu0 %v1687
  %v1715 = vpop.f32.mrf.mxu0
  %v1716 = vadd.f32 0.0, %v1715
  %1717 = vmatmul.f32.gmra.mxu0 %v1690
  %v1718 = vpop.f32.mrf.mxu0
  %v1719 = vadd.f32 0.0, %v1718
  %1720 = vdwg.mxu0
  %v1721 = vadd.f32 %v1659, %v1710
  %v1722 = vadd.f32 %v1662, %v1713
  %v1723 = vadd.f32 %v1665, %v1716
  %v1724 = vadd.f32 %v1668, %v1719
  %s1725 = scalar_lea.vmem [#allocation2], 3
  %v1726 = vld [vmem:[%s1725] ss:$2 sm:$0xff]
  %s1727 = scalar_lea.vmem [#allocation2], 19
  %v1728 = vld [vmem:[%s1727] ss:$2 sm:$0xff]
  %s1729 = scalar_lea.vmem [#allocation2], 43
  %v1730 = vld [vmem:[%s1729] ss:$2 sm:$0xff]
  %s1731 = scalar_lea.vmem [#allocation2], 59
  %v1732 = vld [vmem:[%s1731] ss:$2 sm:$0xff]
  %s1733 = scalar_lea.vmem %s3, 24
  %v1734 = vld [vmem:[%s1733] sm:$0xff]
  %v1736 = vsel %vm1550, %v1726, 0
  %v1739 = vsel %vm1550, %v1728, 0
  %v1742 = vsel %vm1550, %v1730, 0
  %v1745 = vsel %vm1550, %v1732, 0
  %1747 = vmatpush.msra.mxu0 0.0
  %1748 = vmatpush.msra.mxu0 0.0
  %1749 = vmatpush.msra.mxu0 0.0
  %1750 = vmatpush.msra.mxu0 0.0
  %1751 = vmatpush.msra.mxu0 0.0
  %1752 = vmatpush.msra.mxu0 0.0
  %1753 = vmatpush.msra.mxu0 0.0
  %1754 = vmatpush.msra.mxu0 0.0
  %1755 = vmatpush.msra.mxu0 0.0
  %1756 = vmatpush.msra.mxu0 0.0
  %1757 = vmatpush.msra.mxu0 0.0
  %1758 = vmatpush.msra.mxu0 0.0
  %1759 = vmatpush.msra.mxu0 0.0
  %1760 = vmatpush.msra.mxu0 0.0
  %1761 = vmatpush.msra.mxu0 0.0
  %1762 = vmatpush.msra.mxu0 %v1734
  %1763 = vmatmul.f32.gmra.mxu0 %v1736
  %v1764 = vpop.f32.mrf.mxu0
  %v1765 = vadd.f32 0.0, %v1764
  %1766 = vmatmul.f32.gmra.mxu0 %v1739
  %v1767 = vpop.f32.mrf.mxu0
  %v1768 = vadd.f32 0.0, %v1767
  %1769 = vmatmul.f32.gmra.mxu0 %v1742
  %v1770 = vpop.f32.mrf.mxu0
  %v1771 = vadd.f32 0.0, %v1770
  %1772 = vmatmul.f32.gmra.mxu0 %v1745
  %v1773 = vpop.f32.mrf.mxu0
  %v1774 = vadd.f32 0.0, %v1773
  %1775 = vdwg.mxu0
  %v1776 = vadd.f32 %v1721, %v1765
  %v1777 = vadd.f32 %v1722, %v1768
  %v1778 = vadd.f32 %v1723, %v1771
  %v1779 = vadd.f32 %v1724, %v1774
  %s1780 = scalar_lea.vmem [#allocation2], 4
  %v1781 = vld [vmem:[%s1780] ss:$2 sm:$0xff]
  %s1782 = scalar_lea.vmem [#allocation2], 20
  %v1783 = vld [vmem:[%s1782] ss:$2 sm:$0xff]
  %s1784 = scalar_lea.vmem [#allocation2], 44
  %v1785 = vld [vmem:[%s1784] ss:$2 sm:$0xff]
  %s1786 = scalar_lea.vmem [#allocation2], 60
  %v1787 = vld [vmem:[%s1786] ss:$2 sm:$0xff]
  %s1788 = scalar_lea.vmem %s3, 32
  %v1789 = vld [vmem:[%s1788] sm:$0xff]
  %v1791 = vsel %vm1550, %v1781, 0
  %v1794 = vsel %vm1550, %v1783, 0
  %v1797 = vsel %vm1550, %v1785, 0
  %v1800 = vsel %vm1550, %v1787, 0
  %1802 = vmatpush.msra.mxu0 0.0
  %1803 = vmatpush.msra.mxu0 0.0
  %1804 = vmatpush.msra.mxu0 0.0
  %1805 = vmatpush.msra.mxu0 0.0
  %1806 = vmatpush.msra.mxu0 0.0
  %1807 = vmatpush.msra.mxu0 0.0
  %1808 = vmatpush.msra.mxu0 0.0
  %1809 = vmatpush.msra.mxu0 0.0
  %1810 = vmatpush.msra.mxu0 0.0
  %1811 = vmatpush.msra.mxu0 0.0
  %1812 = vmatpush.msra.mxu0 0.0
  %1813 = vmatpush.msra.mxu0 0.0
  %1814 = vmatpush.msra.mxu0 0.0
  %1815 = vmatpush.msra.mxu0 0.0
  %1816 = vmatpush.msra.mxu0 0.0
  %1817 = vmatpush.msra.mxu0 %v1789
  %1818 = vmatmul.f32.gmra.mxu0 %v1791
  %v1819 = vpop.f32.mrf.mxu0
  %v1820 = vadd.f32 0.0, %v1819
  %1821 = vmatmul.f32.gmra.mxu0 %v1794
  %v1822 = vpop.f32.mrf.mxu0
  %v1823 = vadd.f32 0.0, %v1822
  %1824 = vmatmul.f32.gmra.mxu0 %v1797
  %v1825 = vpop.f32.mrf.mxu0
  %v1826 = vadd.f32 0.0, %v1825
  %1827 = vmatmul.f32.gmra.mxu0 %v1800
  %v1828 = vpop.f32.mrf.mxu0
  %v1829 = vadd.f32 0.0, %v1828
  %1830 = vdwg.mxu0
  %v1831 = vadd.f32 %v1776, %v1820
  %v1832 = vadd.f32 %v1777, %v1823
  %v1833 = vadd.f32 %v1778, %v1826
  %v1834 = vadd.f32 %v1779, %v1829
  %s1835 = scalar_lea.vmem [#allocation2], 5
  %v1836 = vld [vmem:[%s1835] ss:$2 sm:$0xff]
  %s1837 = scalar_lea.vmem [#allocation2], 21
  %v1838 = vld [vmem:[%s1837] ss:$2 sm:$0xff]
  %s1839 = scalar_lea.vmem [#allocation2], 45
  %v1840 = vld [vmem:[%s1839] ss:$2 sm:$0xff]
  %s1841 = scalar_lea.vmem [#allocation2], 61
  %v1842 = vld [vmem:[%s1841] ss:$2 sm:$0xff]
  %s1843 = scalar_lea.vmem %s3, 40
  %v1844 = vld [vmem:[%s1843] sm:$0xff]
  %v1846 = vsel %vm1550, %v1836, 0
  %v1849 = vsel %vm1550, %v1838, 0
  %v1852 = vsel %vm1550, %v1840, 0
  %v1855 = vsel %vm1550, %v1842, 0
  %1857 = vmatpush.msra.mxu0 0.0
  %1858 = vmatpush.msra.mxu0 0.0
  %1859 = vmatpush.msra.mxu0 0.0
  %1860 = vmatpush.msra.mxu0 0.0
  %1861 = vmatpush.msra.mxu0 0.0
  %1862 = vmatpush.msra.mxu0 0.0
  %1863 = vmatpush.msra.mxu0 0.0
  %1864 = vmatpush.msra.mxu0 0.0
  %1865 = vmatpush.msra.mxu0 0.0
  %1866 = vmatpush.msra.mxu0 0.0
  %1867 = vmatpush.msra.mxu0 0.0
  %1868 = vmatpush.msra.mxu0 0.0
  %1869 = vmatpush.msra.mxu0 0.0
  %1870 = vmatpush.msra.mxu0 0.0
  %1871 = vmatpush.msra.mxu0 0.0
  %1872 = vmatpush.msra.mxu0 %v1844
  %1873 = vmatmul.f32.gmra.mxu0 %v1846
  %v1874 = vpop.f32.mrf.mxu0
  %v1875 = vadd.f32 0.0, %v1874
  %1876 = vmatmul.f32.gmra.mxu0 %v1849
  %v1877 = vpop.f32.mrf.mxu0
  %v1878 = vadd.f32 0.0, %v1877
  %1879 = vmatmul.f32.gmra.mxu0 %v1852
  %v1880 = vpop.f32.mrf.mxu0
  %v1881 = vadd.f32 0.0, %v1880
  %1882 = vmatmul.f32.gmra.mxu0 %v1855
  %v1883 = vpop.f32.mrf.mxu0
  %v1884 = vadd.f32 0.0, %v1883
  %1885 = vdwg.mxu0
  %v1886 = vadd.f32 %v1831, %v1875
  %v1887 = vadd.f32 %v1832, %v1878
  %v1888 = vadd.f32 %v1833, %v1881
  %v1889 = vadd.f32 %v1834, %v1884
  %s1890 = scalar_lea.vmem [#allocation2], 6
  %v1891 = vld [vmem:[%s1890] ss:$2 sm:$0xff]
  %s1892 = scalar_lea.vmem [#allocation2], 22
  %v1893 = vld [vmem:[%s1892] ss:$2 sm:$0xff]
  %s1894 = scalar_lea.vmem [#allocation2], 46
  %v1895 = vld [vmem:[%s1894] ss:$2 sm:$0xff]
  %s1896 = scalar_lea.vmem [#allocation2], 62
  %v1897 = vld [vmem:[%s1896] ss:$2 sm:$0xff]
  %s1898 = scalar_lea.vmem %s3, 48
  %v1899 = vld [vmem:[%s1898] sm:$0xff]
  %v1901 = vsel %vm1550, %v1891, 0
  %v1904 = vsel %vm1550, %v1893, 0
  %v1907 = vsel %vm1550, %v1895, 0
  %v1910 = vsel %vm1550, %v1897, 0
  %1912 = vmatpush.msra.mxu0 0.0
  %1913 = vmatpush.msra.mxu0 0.0
  %1914 = vmatpush.msra.mxu0 0.0
  %1915 = vmatpush.msra.mxu0 0.0
  %1916 = vmatpush.msra.mxu0 0.0
  %1917 = vmatpush.msra.mxu0 0.0
  %1918 = vmatpush.msra.mxu0 0.0
  %1919 = vmatpush.msra.mxu0 0.0
  %1920 = vmatpush.msra.mxu0 0.0
  %1921 = vmatpush.msra.mxu0 0.0
  %1922 = vmatpush.msra.mxu0 0.0
  %1923 = vmatpush.msra.mxu0 0.0
  %1924 = vmatpush.msra.mxu0 0.0
  %1925 = vmatpush.msra.mxu0 0.0
  %1926 = vmatpush.msra.mxu0 0.0
  %1927 = vmatpush.msra.mxu0 %v1899
  %1928 = vmatmul.f32.gmra.mxu0 %v1901
  %v1929 = vpop.f32.mrf.mxu0
  %v1930 = vadd.f32 0.0, %v1929
  %1931 = vmatmul.f32.gmra.mxu0 %v1904
  %v1932 = vpop.f32.mrf.mxu0
  %v1933 = vadd.f32 0.0, %v1932
  %1934 = vmatmul.f32.gmra.mxu0 %v1907
  %v1935 = vpop.f32.mrf.mxu0
  %v1936 = vadd.f32 0.0, %v1935
  %1937 = vmatmul.f32.gmra.mxu0 %v1910
  %v1938 = vpop.f32.mrf.mxu0
  %v1939 = vadd.f32 0.0, %v1938
  %1940 = vdwg.mxu0
  %v1941 = vadd.f32 %v1886, %v1930
  %v1942 = vadd.f32 %v1887, %v1933
  %v1943 = vadd.f32 %v1888, %v1936
  %v1944 = vadd.f32 %v1889, %v1939
  %s1945 = scalar_lea.vmem [#allocation2], 7
  %v1946 = vld [vmem:[%s1945] ss:$2 sm:$0xff]
  %s1947 = scalar_lea.vmem [#allocation2], 23
  %v1948 = vld [vmem:[%s1947] ss:$2 sm:$0xff]
  %s1949 = scalar_lea.vmem [#allocation2], 47
  %v1950 = vld [vmem:[%s1949] ss:$2 sm:$0xff]
  %s1951 = scalar_lea.vmem [#allocation2], 63
  %v1952 = vld [vmem:[%s1951] ss:$2 sm:$0xff]
  %s1953 = scalar_lea.vmem %s3, 56
  %v1954 = vld [vmem:[%s1953] sm:$0xff]
  %v1956 = vsel %vm1550, %v1946, 0
  %v1959 = vsel %vm1550, %v1948, 0
  %v1962 = vsel %vm1550, %v1950, 0
  %v1965 = vsel %vm1550, %v1952, 0
  %1967 = vmatpush.msra.mxu0 0.0
  %1968 = vmatpush.msra.mxu0 0.0
  %1969 = vmatpush.msra.mxu0 0.0
  %1970 = vmatpush.msra.mxu0 0.0
  %1971 = vmatpush.msra.mxu0 0.0
  %1972 = vmatpush.msra.mxu0 0.0
  %1973 = vmatpush.msra.mxu0 0.0
  %1974 = vmatpush.msra.mxu0 0.0
  %1975 = vmatpush.msra.mxu0 0.0
  %1976 = vmatpush.msra.mxu0 0.0
  %1977 = vmatpush.msra.mxu0 0.0
  %1978 = vmatpush.msra.mxu0 0.0
  %1979 = vmatpush.msra.mxu0 0.0
  %1980 = vmatpush.msra.mxu0 0.0
  %1981 = vmatpush.msra.mxu0 0.0
  %1982 = vmatpush.msra.mxu0 %v1954
  %1983 = vmatmul.f32.gmra.mxu0 %v1956
  %v1984 = vpop.f32.mrf.mxu0
  %v1985 = vadd.f32 0.0, %v1984
  %1986 = vmatmul.f32.gmra.mxu0 %v1959
  %v1987 = vpop.f32.mrf.mxu0
  %v1988 = vadd.f32 0.0, %v1987
  %1989 = vmatmul.f32.gmra.mxu0 %v1962
  %v1990 = vpop.f32.mrf.mxu0
  %v1991 = vadd.f32 0.0, %v1990
  %1992 = vmatmul.f32.gmra.mxu0 %v1965
  %v1993 = vpop.f32.mrf.mxu0
  %v1994 = vadd.f32 0.0, %v1993
  %1995 = vdwg.mxu0
  %v1996 = vadd.f32 %v1941, %v1985
  %v1997 = vadd.f32 %v1942, %v1988
  %v1998 = vadd.f32 %v1943, %v1991
  %v1999 = vadd.f32 %v1944, %v1994
  %v2000 = vld [vmem:[%s4] sm:$0x1]
  %v2002 = vperm.slane %v2000, 0
  %v2004 = vadd.f32 %v1996, %v2002
  %v2005 = vadd.f32 %v1997, %v2002
  %v2006 = vadd.f32 %v1998, %v2002
  %v2007 = vadd.f32 %v1999, %v2002
  %v2008 = vmul.f32 %v2004, 0.2
  %v2009 = vmul.f32 %v2005, 0.2
  %v2010 = vmul.f32 %v2006, 0.2
  %v2011 = vmul.f32 %v2007, 0.2
  %v2012 = vmax.f32 %v2004, %v2008
  %v2013 = vmax.f32 %v2005, %v2009
  %v2014 = vmax.f32 %v2006, %v2010
  %v2015 = vmax.f32 %v2007, %v2011
  %vm2016 = vcmask 130048
  %2017 = vst.msk [vmem:[#allocation3] sm:$0xff] %vm2016, 0.0
  %2018 = vst.msk [vmem:[#allocation3 + $0x8] sm:$0xff] %vm2016, 0.0
  %vm2019 = vcmask 123904
  %2020 = vst.msk [vmem:[#allocation3 + $0x10] sm:$0x3] %vm2019, 0.0
  %2021 = vst.msk [vmem:[#allocation3 + $0x18] sm:$0xff] %vm2016, 0.0
  %2022 = vst.msk [vmem:[#allocation3 + $0x20] sm:$0xff] %vm2016, 0.0
  %2023 = vst.msk [vmem:[#allocation3 + $0x28] sm:$0x3] %vm2019, 0.0
  %2024 = vst.msk [vmem:[#allocation3 + $0x1] sm:$0xff] %vm2016, %v2012
  %2025 = vst.msk [vmem:[#allocation3 + $0x9] sm:$0xff] %vm2016, %v2013
  %2026 = vst.msk [vmem:[#allocation3 + $0x19] sm:$0xff] %vm2016, %v2014
  %2027 = vst.msk [vmem:[#allocation3 + $0x21] sm:$0xff] %vm2016, %v2015
  %v2028 = vld [vmem:[#allocation3] ss:$2 sm:$0xff]
  %s2029 = scalar_lea.vmem [#allocation3], 24
  %v2030 = vld [vmem:[%s2029] ss:$2 sm:$0xff]
  %v2031 = vld [vmem:[%s5] sm:$0xff]
  %v2032 = vld [vmem:[%s5 + $0x8] sm:$0xff]
  %s2033 = scalar_lea.vmem [#allocation3], 1
  %v2034 = vld [vmem:[%s2033] ss:$2 sm:$0xff]
  %s2035 = scalar_lea.vmem [#allocation3], 25
  %v2036 = vld [vmem:[%s2035] ss:$2 sm:$0xff]
  %s2037 = scalar_lea.vmem %s5, 16
  %v2038 = vld [vmem:[%s2037] sm:$0xff]
  %v2039 = vld [vmem:[%s2037 + $0x8] sm:$0xff]
  %v2041 = vsel %vm2016, %v2034, 0
  %v2044 = vsel %vm2016, %v2036, 0
  %2046 = vmatpush.msra.mxu0 0.0
  %2047 = vmatpush.msra.mxu0 0.0
  %2048 = vmatpush.msra.mxu0 0.0
  %2049 = vmatpush.msra.mxu0 0.0
  %2050 = vmatpush.msra.mxu0 0.0
  %2051 = vmatpush.msra.mxu0 0.0
  %2052 = vmatpush.msra.mxu0 0.0
  %2053 = vmatpush.msra.mxu0 0.0
  %2054 = vmatpush.msra.mxu0 0.0
  %2055 = vmatpush.msra.mxu0 0.0
  %2056 = vmatpush.msra.mxu0 0.0
  %2057 = vmatpush.msra.mxu0 0.0
  %2058 = vmatpush.msra.mxu0 0.0
  %2059 = vmatpush.msra.mxu0 0.0
  %2060 = vmatpush.msra.mxu0 %v2039
  %2061 = vmatpush.msra.mxu0 %v2038
  %2062 = vmatmul.f32.gmra.mxu0 %v2041
  %v2063 = vpop.f32.mrf.mxu0
  %v2064 = vadd.f32 0.0, %v2063
  %2065 = vmatmul.f32.gmra.mxu0 %v2044
  %v2066 = vpop.f32.mrf.mxu0
  %v2067 = vadd.f32 0.0, %v2066
  %2068 = vdwg.mxu0
  %v2070 = vsel %vm2016, %v2028, 0
  %v2073 = vsel %vm2016, %v2030, 0
  %2075 = vmatpush.msra.mxu0 0.0
  %2076 = vmatpush.msra.mxu0 0.0
  %2077 = vmatpush.msra.mxu0 0.0
  %2078 = vmatpush.msra.mxu0 0.0
  %2079 = vmatpush.msra.mxu0 0.0
  %2080 = vmatpush.msra.mxu0 0.0
  %2081 = vmatpush.msra.mxu0 0.0
  %2082 = vmatpush.msra.mxu0 0.0
  %2083 = vmatpush.msra.mxu0 0.0
  %2084 = vmatpush.msra.mxu0 0.0
  %2085 = vmatpush.msra.mxu0 0.0
  %2086 = vmatpush.msra.mxu0 0.0
  %2087 = vmatpush.msra.mxu0 0.0
  %2088 = vmatpush.msra.mxu0 0.0
  %2089 = vmatpush.msra.mxu0 %v2032
  %2090 = vmatpush.msra.mxu0 %v2031
  %2091 = vmatmul.f32.gmra.mxu0 %v2070
  %v2092 = vpop.f32.mrf.mxu0
  %v2093 = vadd.f32 %v2064, %v2092
  %2094 = vmatmul.f32.gmra.mxu0 %v2073
  %v2095 = vpop.f32.mrf.mxu0
  %v2096 = vadd.f32 %v2067, %v2095
  %2097 = vdwg.mxu0
  %s2098 = scalar_lea.vmem [#allocation3], 2
  %v2099 = vld [vmem:[%s2098] ss:$2 sm:$0xff]
  %s2100 = scalar_lea.vmem [#allocation3], 26
  %v2101 = vld [vmem:[%s2100] ss:$2 sm:$0xff]
  %s2102 = scalar_lea.vmem %s5, 32
  %v2103 = vld [vmem:[%s2102] sm:$0xff]
  %v2104 = vld [vmem:[%s2102 + $0x8] sm:$0xff]
  %v2106 = vsel %vm2016, %v2099, 0
  %v2109 = vsel %vm2016, %v2101, 0
  %2111 = vmatpush.msra.mxu0 0.0
  %2112 = vmatpush.msra.mxu0 0.0
  %2113 = vmatpush.msra.mxu0 0.0
  %2114 = vmatpush.msra.mxu0 0.0
  %2115 = vmatpush.msra.mxu0 0.0
  %2116 = vmatpush.msra.mxu0 0.0
  %2117 = vmatpush.msra.mxu0 0.0
  %2118 = vmatpush.msra.mxu0 0.0
  %2119 = vmatpush.msra.mxu0 0.0
  %2120 = vmatpush.msra.mxu0 0.0
  %2121 = vmatpush.msra.mxu0 0.0
  %2122 = vmatpush.msra.mxu0 0.0
  %2123 = vmatpush.msra.mxu0 0.0
  %2124 = vmatpush.msra.mxu0 0.0
  %2125 = vmatpush.msra.mxu0 %v2104
  %2126 = vmatpush.msra.mxu0 %v2103
  %2127 = vmatmul.f32.gmra.mxu0 %v2106
  %v2128 = vpop.f32.mrf.mxu0
  %v2129 = vadd.f32 0.0, %v2128
  %2130 = vmatmul.f32.gmra.mxu0 %v2109
  %v2131 = vpop.f32.mrf.mxu0
  %v2132 = vadd.f32 0.0, %v2131
  %2133 = vdwg.mxu0
  %v2134 = vadd.f32 %v2093, %v2129
  %v2135 = vadd.f32 %v2096, %v2132
  %s2136 = scalar_lea.vmem [#allocation3], 3
  %v2137 = vld [vmem:[%s2136] ss:$2 sm:$0xff]
  %s2138 = scalar_lea.vmem [#allocation3], 27
  %v2139 = vld [vmem:[%s2138] ss:$2 sm:$0xff]
  %s2140 = scalar_lea.vmem %s5, 48
  %v2141 = vld [vmem:[%s2140] sm:$0xff]
  %v2142 = vld [vmem:[%s2140 + $0x8] sm:$0xff]
  %v2144 = vsel %vm2016, %v2137, 0
  %v2147 = vsel %vm2016, %v2139, 0
  %2149 = vmatpush.msra.mxu0 0.0
  %2150 = vmatpush.msra.mxu0 0.0
  %2151 = vmatpush.msra.mxu0 0.0
  %2152 = vmatpush.msra.mxu0 0.0
  %2153 = vmatpush.msra.mxu0 0.0
  %2154 = vmatpush.msra.mxu0 0.0
  %2155 = vmatpush.msra.mxu0 0.0
  %2156 = vmatpush.msra.mxu0 0.0
  %2157 = vmatpush.msra.mxu0 0.0
  %2158 = vmatpush.msra.mxu0 0.0
  %2159 = vmatpush.msra.mxu0 0.0
  %2160 = vmatpush.msra.mxu0 0.0
  %2161 = vmatpush.msra.mxu0 0.0
  %2162 = vmatpush.msra.mxu0 0.0
  %2163 = vmatpush.msra.mxu0 %v2142
  %2164 = vmatpush.msra.mxu0 %v2141
  %2165 = vmatmul.f32.gmra.mxu0 %v2144
  %v2166 = vpop.f32.mrf.mxu0
  %v2167 = vadd.f32 0.0, %v2166
  %2168 = vmatmul.f32.gmra.mxu0 %v2147
  %v2169 = vpop.f32.mrf.mxu0
  %v2170 = vadd.f32 0.0, %v2169
  %2171 = vdwg.mxu0
  %v2172 = vadd.f32 %v2134, %v2167
  %v2173 = vadd.f32 %v2135, %v2170
  %v2174 = vld [vmem:[%s6] sm:$0x1]
  %v2176 = vperm.slane %v2174, 0
  %v2178 = vadd.f32 %v2172, %v2176
  %v2179 = vadd.f32 %v2173, %v2176
  %v2180 = vmul.f32 %v2178, 0.2
  %v2181 = vmul.f32 %v2179, 0.2
  %v2182 = vmax.f32 %v2178, %v2180
  %v2183 = vmax.f32 %v2179, %v2181
  %v2184 = vld [vmem:[%s7] sm:$0xff]
  %v2185 = vmul.f32 %v2182, %v2184
  %v2186 = vmul.f32 %v2183, %v2184
  %vm2187 = vcmask 261120
  %v2188 = vsel %vm2187, %v2185, 0.0
  %2189 = vadd.xlane.f32.xlu0 %v2188
  %v2190 = vpop.xlane.xlu0 %2189
  %v2191 = vsel %vm2187, %v2186, 0.0
  %2192 = vadd.xlane.f32.xlu0 %v2191
  %v2193 = vpop.xlane.xlu0 %2192
  %v2194 = vrot.slane %v2190, 4
  %v2195 = vadd.f32 %v2190, %v2194
  %v2196 = vrot.slane %v2195, 2
  %v2197 = vadd.f32 %v2195, %v2196
  %v2198 = vrot.slane %v2197, 1
  %v2199 = vadd.f32 %v2197, %v2198
  %v2200 = vrot.slane %v2193, 4
  %v2201 = vadd.f32 %v2193, %v2200
  %v2202 = vrot.slane %v2201, 2
  %v2203 = vadd.f32 %v2201, %v2202
  %v2204 = vrot.slane %v2203, 1
  %v2205 = vadd.f32 %v2203, %v2204
  %v2206 = vld [vmem:[#allocation4] sm:$0x1]
  %v2208 = vperm.slane %v2206, 0
  %v2210 = vadd.f32 %v2199, %v2208
  %v2211 = vadd.f32 %v2205, %v2208
  %2212 = vst [vmem:[%s9] sm:$0xff] 0.0
  %v2215 = vrot.slane %v2211, 7
  %vm2216 = vcmask 1041409
  %v2217 = vsel %vm2216, %v2215, %v2210
  %vm2219 = vcmask 1024
  %2220 = vst.msk [vmem:[%s9] sm:$0x3] %vm2219, %v2217
  // Predicated region
  $region38: #{discriminator_forward.1} parent=0 // pred_check
    _
  $region39: #{discriminator_forward.1} parent=0 // pred_check_branch
    %2222 = sbr.rel (0) target = $region41
  $region40: #{discriminator_forward.1} parent=0 // pred_region
    _
  $region41: #{discriminator_forward.1} parent=0 // pred_fallthru
    _
  // Predicated region
  $region42: #{discriminator_forward.1} parent=0 // pred_check
    _
  $region43: #{discriminator_forward.1} parent=0 // pred_check_branch
    %2224 = sbr.rel (0) target = $region45
  $region44: #{discriminator_forward.1} parent=0 // pred_region
    _
  $region45: #{discriminator_forward.1} parent=0 // pred_fallthru
    _

</llo_original>
